<compile_context>
chip_gen: v7x
topology: tpu7x:2x2x1
jax: 0.10.0
libtpu: 0.0.40
codegen_flags: <defaults>
</compile_context>

<pallas_src>
import functools

import jax
import jax.numpy as jnp
from jax import lax
from jax.experimental import pallas as pl
from jax.experimental.pallas import tpu as pltpu


def _sppf_kernel(x_ref, w1_ref, b1_ref, w2_ref, b2_ref, o_ref, *, H, W, IMG):
    HW = H * W
    L = IMG * HW
    C_ = w1_ref.shape[0]

    # ---- cv1: folded 1x1 conv + BN, then ReLU.  bf16 operands, f32 acc. ----
    x = x_ref[0]                                            # (C1, L) bf16
    xc = jnp.dot(w1_ref[...], x, preferred_element_type=jnp.float32)
    xc = jnp.maximum(xc + b1_ref[...], 0.0)                 # (C_, L) f32, >= 0

    # ---- Validity masks for the separable 5x5 (pad=2) max pool. ----
    # Lane l = img*HW + within; within-image coords stop rolls from leaking
    # across image boundaries.  Broadcast to (C_, L) ONCE, reused by all
    # three pool applications (24 selects total).
    flat = lax.broadcasted_iota(jnp.int32, (1, L), 1)
    within = flat % HW
    col = within % W
    w_fwd = {s: jnp.broadcast_to(col < (W - s), (C_, L)) for s in (1, 2)}
    w_bwd = {s: jnp.broadcast_to(col >= s, (C_, L)) for s in (1, 2)}
    h_fwd = {s: jnp.broadcast_to(within < (HW - s * W), (C_, L)) for s in (1, 2)}
    h_bwd = {s: jnp.broadcast_to(within >= s * W, (C_, L)) for s in (1, 2)}

    def pool5(a):
        # Inputs are >= 0 (post-ReLU / max of post-ReLU) and every window
        # contains its own (unmasked) center, so filling invalid taps with 0
        # is exactly equivalent to -inf padding.
        m = a                                               # window-5 max along W
        for s in (1, 2):
            m = jnp.maximum(m, jnp.where(w_fwd[s], pltpu.roll(a, L - s, axis=1), 0.0))
            m = jnp.maximum(m, jnp.where(w_bwd[s], pltpu.roll(a, s, axis=1), 0.0))
        r = m                                               # ... then along H (separable)
        for s in (1, 2):
            d = s * W
            r = jnp.maximum(r, jnp.where(h_fwd[s], pltpu.roll(m, L - d, axis=1), 0.0))
            r = jnp.maximum(r, jnp.where(h_bwd[s], pltpu.roll(m, d, axis=1), 0.0))
        return r

    y1 = pool5(xc)
    y2 = pool5(y1)
    y3 = pool5(y2)

    # ---- cv2 on cat([xc, y1, y2, y3]) WITHOUT materializing the concat. ----
    # Four K=C_ bf16 dots (pre-split folded weight), balanced-tree accumulate.
    d0 = jnp.dot(w2_ref[0], xc.astype(jnp.bfloat16), preferred_element_type=jnp.float32)
    d1 = jnp.dot(w2_ref[1], y1.astype(jnp.bfloat16), preferred_element_type=jnp.float32)
    d2 = jnp.dot(w2_ref[2], y2.astype(jnp.bfloat16), preferred_element_type=jnp.float32)
    d3 = jnp.dot(w2_ref[3], y3.astype(jnp.bfloat16), preferred_element_type=jnp.float32)
    z = (d0 + d1) + (d2 + d3)
    o_ref[0] = jnp.maximum(z + b2_ref[...], 0.0)            # (C2, L) f32


def _vmem_bytes_estimate(C1, C_, C2, L):
    f32, bf16 = 4, 2
    blocks = 2 * (C1 * L * bf16 + C2 * L * f32)          # double-buffered in/out blocks
    weights = 2 * (C_ * C1 * bf16 + 4 * C2 * C_ * bf16 + (C_ + C2) * f32)
    live = 6 * C_ * L * f32                              # xc, y1..y3, pool temp, bf16 copy
    masks = 8 * C_ * L * f32                             # hoisted masks (generous bound)
    return blocks + weights + live + masks


def _pick_images_per_step(N, C1, C_, C2, HW):
    # Fold as many images as possible into the lane axis while staying well
    # under the smallest-generation VMEM (v7x: 64 MiB physical).
    budget = 40 * 1024 * 1024
    for img in (8, 4, 2, 1):
        if N % img:
            continue
        if img == 1 or _vmem_bytes_estimate(C1, C_, C2, img * HW) <= budget:
            return img
    return 1


def sppf_forward(x_nchw, w1_eff, b1_eff, w2_eff, b2_eff):
    """SPPF forward (eval mode).  x_nchw: (N, C1, H, W) f32.
    w1_eff: (C_, C1), b1_eff: (C_,)  -- folded cv1 conv+BN.
    w2_eff: (C2, 4*C_), b2_eff: (C2,) -- folded cv2 conv+BN.
    Returns (N, C2, H, W) f32."""
    N, C1, H, W = x_nchw.shape
    HW = H * W
    C_ = w1_eff.shape[0]
    C2 = w2_eff.shape[0]

    IMG = _pick_images_per_step(N, C1, C_, C2, HW)
    G = N // IMG
    L = IMG * HW

    # Fold IMG images into the lane axis: (N,C1,H,W) -> (G, C1, IMG*HW), bf16.
    # (Layout plumbing; the fused bf16 cast halves the kernel's input DMA.)
    x_flat = (x_nchw.reshape(G, IMG, C1, HW)
              .transpose(0, 2, 1, 3)
              .reshape(G, C1, L)
              .astype(jnp.bfloat16))

    w1_b = w1_eff.astype(jnp.bfloat16)                            # (C_, C1)
    w2_stk = (w2_eff.reshape(C2, 4, C_)
              .transpose(1, 0, 2)
              .astype(jnp.bfloat16))                              # (4, C2, C_)
    b1 = b1_eff.reshape(C_, 1).astype(jnp.float32)
    b2 = b2_eff.reshape(C2, 1).astype(jnp.float32)

    kernel = functools.partial(_sppf_kernel, H=H, W=W, IMG=IMG)
    vmem_limit = int(min(max(32 * 1024 * 1024,
                             int(1.25 * _vmem_bytes_estimate(C1, C_, C2, L))),
                         64 * 1024 * 1024))

    out = pl.pallas_call(
        kernel,
        out_shape=jax.ShapeDtypeStruct((G, C2, L), jnp.float32),
        grid_spec=pl.GridSpec(
            grid=(G,),
            in_specs=[
                pl.BlockSpec((1, C1, L), lambda i: (i, 0, 0)),
                pl.BlockSpec((C_, C1), lambda i: (0, 0)),
                pl.BlockSpec((C_, 1), lambda i: (0, 0)),
                pl.BlockSpec((4, C2, C_), lambda i: (0, 0, 0)),
                pl.BlockSpec((C2, 1), lambda i: (0, 0)),
            ],
            out_specs=pl.BlockSpec((1, C2, L), lambda i: (i, 0, 0)),
        ),
        compiler_params=pltpu.CompilerParams(
            dimension_semantics=("parallel",),
            vmem_limit_bytes=vmem_limit,
        ),
    )(x_flat, w1_b, b1, w2_stk, b2)

    # Unfold the lane axis back to (N, C2, H, W).
    return (out.reshape(G, C2, IMG, HW)
            .transpose(0, 2, 1, 3)
            .reshape(N, C2, H, W))


# --------------------------------------------------------------------------
# Host-side helpers: Conv+BN (eval mode) folding and a pure-JAX reference
# that mirrors the kernel's bf16-operand / f32-accumulate matmuls.
# --------------------------------------------------------------------------
def _fold_conv_bn(w, gamma, beta, mean, var, eps=1e-5):
    scale = gamma / jnp.sqrt(var + eps)
    return w * scale[:, None], beta - scale * mean


def _bf16_round(t):
    return t.astype(jnp.bfloat16).astype(jnp.float32)


def _sppf_reference(x, w1e, b1e, w2e, b2e):
    def cbr(t, we, be):
        y = jnp.einsum("oc,nchw->nohw", _bf16_round(we), _bf16_round(t))
        return jnp.maximum(y + be[None, :, None, None], 0.0)

    def mp(t):
        return lax.reduce_window(
            t, -jnp.inf, lax.max,
            (1, 1, 5, 5), (1, 1, 1, 1),
            [(0, 0), (0, 0), (2, 2), (2, 2)])

    xc = cbr(x, w1e, b1e)
    y1 = mp(xc)
    y2 = mp(y1)
    y3 = mp(y2)
    return cbr(jnp.concatenate([xc, y1, y2, y3], axis=1), w2e, b2e)


if __name__ == "__main__":
    key = jax.random.PRNGKey(0)
    ks = jax.random.split(key, 11)

    # Small shapes consistent with SPPF: NCHW input, c1=8 -> c_=4, c2=16, k=5.
    N, C1, H, W = 2, 8, 16, 16
    C2 = 16
    C_ = C1 // 2
    EPS = 1e-5

    x = jax.random.normal(ks[0], (N, C1, H, W), jnp.float32)

    # cv1 = Conv2d(C1, C_, 1, bias=False) + BatchNorm2d(C_) + ReLU
    w1 = jax.random.normal(ks[1], (C_, C1), jnp.float32) * 0.3
    g1 = jax.random.uniform(ks[2], (C_,), jnp.float32, minval=0.5, maxval=1.5)
    beta1 = jax.random.normal(ks[3], (C_,), jnp.float32) * 0.1
    mu1 = jax.random.normal(ks[4], (C_,), jnp.float32) * 0.1
    var1 = jax.random.uniform(ks[5], (C_,), jnp.float32, minval=0.5, maxval=1.5)

    # cv2 = Conv2d(4*C_, C2, 1, bias=False) + BatchNorm2d(C2) + ReLU
    w2 = jax.random.normal(ks[6], (C2, 4 * C_), jnp.float32) * 0.2
    g2 = jax.random.uniform(ks[7], (C2,), jnp.float32, minval=0.5, maxval=1.5)
    beta2 = jax.random.normal(ks[8], (C2,), jnp.float32) * 0.1
    mu2 = jax.random.normal(ks[9], (C2,), jnp.float32) * 0.1
    var2 = jax.random.uniform(ks[10], (C2,), jnp.float32, minval=0.5, maxval=1.5)

    w1e, b1e = _fold_conv_bn(w1, g1, beta1, mu1, var1, EPS)
    w2e, b2e = _fold_conv_bn(w2, g2, beta2, mu2, var2, EPS)

    out = sppf_forward(x, w1e, b1e, w2e, b2e)
    out = jax.block_until_ready(out)

    ref = _sppf_reference(x, w1e, b1e, w2e, b2e)
    err = float(jnp.max(jnp.abs(out - ref)))
    assert err < 1e-2, f"max abs error vs bf16-matmul reference: {err}"
    print("KERNEL_OK")
</pallas_src>

<mosaic_0001>
module attributes {stable_mosaic.version = 11 : i64} {
  func.func @_sppf_kernel(%arg0: i32, %arg1: memref<1x8x512xbf16, #tpu.memory_space<vmem>>, %arg2: memref<4x8xbf16, #tpu.memory_space<vmem>>, %arg3: memref<4x1xf32, #tpu.memory_space<vmem>>, %arg4: memref<4x16x4xbf16, #tpu.memory_space<vmem>>, %arg5: memref<16x1xf32, #tpu.memory_space<vmem>>, %arg6: memref<1x16x512xf32, #tpu.memory_space<vmem>>) attributes {dimension_semantics = [#tpu.dimension_semantics<parallel>], iteration_bounds = array<i64: 1>, scalar_prefetch = 0 : i64, scratch_operands = 0 : i64, tpu.core_type = #tpu.core_type<tc>, window_params = [{transform_indices = @transform_0, window_bounds = array<i64: 1, 8, 512>}, {pipeline_mode = #tpu.pipeline_mode<synchronous>, transform_indices = @transform_1, window_bounds = array<i64: 4, 8>}, {pipeline_mode = #tpu.pipeline_mode<synchronous>, transform_indices = @transform_2, window_bounds = array<i64: 4, 1>}, {pipeline_mode = #tpu.pipeline_mode<synchronous>, transform_indices = @transform_3, window_bounds = array<i64: 4, 16, 4>}, {pipeline_mode = #tpu.pipeline_mode<synchronous>, transform_indices = @transform_4, window_bounds = array<i64: 16, 1>}, {transform_indices = @transform_5, window_bounds = array<i64: 1, 16, 512>}]} {
    %c0 = arith.constant 0 : index
    %c0_0 = arith.constant 0 : index
    %c0_1 = arith.constant 0 : index
    %0 = vector.load %arg1[%c0, %c0_0, %c0_1] : memref<1x8x512xbf16, #tpu.memory_space<vmem>>, vector<1x8x512xbf16>
    %1 = vector.shape_cast %0 : vector<1x8x512xbf16> to vector<8x512xbf16>
    %c0_2 = arith.constant 0 : index
    %c0_3 = arith.constant 0 : index
    %2 = vector.load %arg2[%c0_2, %c0_3] : memref<4x8xbf16, #tpu.memory_space<vmem>>, vector<4x8xbf16>
    %cst = arith.constant dense<0.000000e+00> : vector<4x512xf32>
    %3 = tpu.matmul %2, %1, %cst {dimension_numbers = #tpu.dot_dimension_numbers<[1], [0], [0], [1], [0, 0, 1, 1], [], []>} : vector<4x8xbf16>, vector<8x512xbf16>, vector<4x512xf32> -> vector<4x512xf32>
    %c0_4 = arith.constant 0 : index
    %c0_5 = arith.constant 0 : index
    %4 = vector.load %arg3[%c0_4, %c0_5] : memref<4x1xf32, #tpu.memory_space<vmem>>, vector<4x1xf32>
    %5 = vector.broadcast %4 : vector<4x1xf32> to vector<4x512xf32>
    %6 = arith.addf %3, %5 : vector<4x512xf32>
    %cst_6 = arith.constant 0.000000e+00 : f32
    %7 = vector.broadcast %cst_6 : f32 to vector<4x512xf32>
    %8 = arith.maximumf %6, %7 : vector<4x512xf32>
    %9 = tpu.iota {dimensions = array<i32: 1>} : vector<1x512xi32>
    %c256_i32 = arith.constant 256 : i32
    %c0_i32 = arith.constant 0 : i32
    %10 = arith.cmpi eq, %c256_i32, %c0_i32 : i32
    %c1_i32 = arith.constant 1 : i32
    %11 = arith.select %10, %c1_i32, %c256_i32 : i32
    %12 = vector.broadcast %11 : i32 to vector<1x512xi32>
    %13 = arith.remsi %9, %12 : vector<1x512xi32>
    %c0_i32_7 = arith.constant 0 : i32
    %14 = vector.broadcast %c0_i32_7 : i32 to vector<1x512xi32>
    %15 = arith.cmpi ne, %13, %14 : vector<1x512xi32>
    %c0_i32_8 = arith.constant 0 : i32
    %16 = vector.broadcast %c0_i32_8 : i32 to vector<1x512xi32>
    %17 = arith.cmpi slt, %13, %16 : vector<1x512xi32>
    %c0_i32_9 = arith.constant 0 : i32
    %18 = arith.cmpi slt, %11, %c0_i32_9 : i32
    %19 = vector.broadcast %18 : i1 to vector<1x512xi1>
    %20 = vector.broadcast %19 : vector<1x512xi1> to vector<1x512xi1>
    %21 = arith.xori %17, %20 : vector<1x512xi1>
    %22 = arith.andi %21, %15 : vector<1x512xi1>
    %23 = vector.broadcast %11 : i32 to vector<1x512xi32>
    %24 = arith.addi %13, %23 : vector<1x512xi32>
    %25 = arith.select %22, %24, %13 : vector<1x512xi1>, vector<1x512xi32>
    %c16_i32 = arith.constant 16 : i32
    %c0_i32_10 = arith.constant 0 : i32
    %26 = arith.cmpi eq, %c16_i32, %c0_i32_10 : i32
    %c1_i32_11 = arith.constant 1 : i32
    %27 = arith.select %26, %c1_i32_11, %c16_i32 : i32
    %28 = vector.broadcast %27 : i32 to vector<1x512xi32>
    %29 = arith.remsi %25, %28 : vector<1x512xi32>
    %c0_i32_12 = arith.constant 0 : i32
    %30 = vector.broadcast %c0_i32_12 : i32 to vector<1x512xi32>
    %31 = arith.cmpi ne, %29, %30 : vector<1x512xi32>
    %c0_i32_13 = arith.constant 0 : i32
    %32 = vector.broadcast %c0_i32_13 : i32 to vector<1x512xi32>
    %33 = arith.cmpi slt, %29, %32 : vector<1x512xi32>
    %c0_i32_14 = arith.constant 0 : i32
    %34 = arith.cmpi slt, %27, %c0_i32_14 : i32
    %35 = vector.broadcast %34 : i1 to vector<1x512xi1>
    %36 = vector.broadcast %35 : vector<1x512xi1> to vector<1x512xi1>
    %37 = arith.xori %33, %36 : vector<1x512xi1>
    %38 = arith.andi %37, %31 : vector<1x512xi1>
    %39 = vector.broadcast %27 : i32 to vector<1x512xi32>
    %40 = arith.addi %29, %39 : vector<1x512xi32>
    %41 = arith.select %38, %40, %29 : vector<1x512xi1>, vector<1x512xi32>
    %c15_i32 = arith.constant 15 : i32
    %42 = vector.broadcast %c15_i32 : i32 to vector<1x512xi32>
    %43 = arith.cmpi slt, %41, %42 : vector<1x512xi32>
    %44 = vector.shape_cast %43 : vector<1x512xi1> to vector<1x512xi1>
    %45 = vector.broadcast %44 : vector<1x512xi1> to vector<4x512xi1>
    %c14_i32 = arith.constant 14 : i32
    %46 = vector.broadcast %c14_i32 : i32 to vector<1x512xi32>
    %47 = arith.cmpi slt, %41, %46 : vector<1x512xi32>
    %48 = vector.shape_cast %47 : vector<1x512xi1> to vector<1x512xi1>
    %49 = vector.broadcast %48 : vector<1x512xi1> to vector<4x512xi1>
    %c1_i32_15 = arith.constant 1 : i32
    %50 = vector.broadcast %c1_i32_15 : i32 to vector<1x512xi32>
    %51 = arith.cmpi sge, %41, %50 : vector<1x512xi32>
    %52 = vector.shape_cast %51 : vector<1x512xi1> to vector<1x512xi1>
    %53 = vector.broadcast %52 : vector<1x512xi1> to vector<4x512xi1>
    %c2_i32 = arith.constant 2 : i32
    %54 = vector.broadcast %c2_i32 : i32 to vector<1x512xi32>
    %55 = arith.cmpi sge, %41, %54 : vector<1x512xi32>
    %56 = vector.shape_cast %55 : vector<1x512xi1> to vector<1x512xi1>
    %57 = vector.broadcast %56 : vector<1x512xi1> to vector<4x512xi1>
    %c240_i32 = arith.constant 240 : i32
    %58 = vector.broadcast %c240_i32 : i32 to vector<1x512xi32>
    %59 = arith.cmpi slt, %25, %58 : vector<1x512xi32>
    %60 = vector.shape_cast %59 : vector<1x512xi1> to vector<1x512xi1>
    %61 = vector.broadcast %60 : vector<1x512xi1> to vector<4x512xi1>
    %c224_i32 = arith.constant 224 : i32
    %62 = vector.broadcast %c224_i32 : i32 to vector<1x512xi32>
    %63 = arith.cmpi slt, %25, %62 : vector<1x512xi32>
    %64 = vector.shape_cast %63 : vector<1x512xi1> to vector<1x512xi1>
    %65 = vector.broadcast %64 : vector<1x512xi1> to vector<4x512xi1>
    %c16_i32_16 = arith.constant 16 : i32
    %66 = vector.broadcast %c16_i32_16 : i32 to vector<1x512xi32>
    %67 = arith.cmpi sge, %25, %66 : vector<1x512xi32>
    %68 = vector.shape_cast %67 : vector<1x512xi1> to vector<1x512xi1>
    %69 = vector.broadcast %68 : vector<1x512xi1> to vector<4x512xi1>
    %c32_i32 = arith.constant 32 : i32
    %70 = vector.broadcast %c32_i32 : i32 to vector<1x512xi32>
    %71 = arith.cmpi sge, %25, %70 : vector<1x512xi32>
    %72 = vector.shape_cast %71 : vector<1x512xi1> to vector<1x512xi1>
    %73 = vector.broadcast %72 : vector<1x512xi1> to vector<4x512xi1>
    %c511_i32 = arith.constant 511 : i32
    %74 = tpu.dynamic_rotate %8 by %c511_i32 dim 1 : vector<4x512xf32>, i32 -> vector<4x512xf32>
    %cst_17 = arith.constant 0.000000e+00 : f32
    %75 = vector.broadcast %cst_17 : f32 to vector<4x512xf32>
    %76 = arith.select %45, %74, %75 : vector<4x512xi1>, vector<4x512xf32>
    %77 = arith.maximumf %8, %76 : vector<4x512xf32>
    %c1_i32_18 = arith.constant 1 : i32
    %78 = tpu.dynamic_rotate %8 by %c1_i32_18 dim 1 : vector<4x512xf32>, i32 -> vector<4x512xf32>
    %cst_19 = arith.constant 0.000000e+00 : f32
    %79 = vector.broadcast %cst_19 : f32 to vector<4x512xf32>
    %80 = arith.select %53, %78, %79 : vector<4x512xi1>, vector<4x512xf32>
    %81 = arith.maximumf %77, %80 : vector<4x512xf32>
    %c510_i32 = arith.constant 510 : i32
    %82 = tpu.dynamic_rotate %8 by %c510_i32 dim 1 : vector<4x512xf32>, i32 -> vector<4x512xf32>
    %cst_20 = arith.constant 0.000000e+00 : f32
    %83 = vector.broadcast %cst_20 : f32 to vector<4x512xf32>
    %84 = arith.select %49, %82, %83 : vector<4x512xi1>, vector<4x512xf32>
    %85 = arith.maximumf %81, %84 : vector<4x512xf32>
    %c2_i32_21 = arith.constant 2 : i32
    %86 = tpu.dynamic_rotate %8 by %c2_i32_21 dim 1 : vector<4x512xf32>, i32 -> vector<4x512xf32>
    %cst_22 = arith.constant 0.000000e+00 : f32
    %87 = vector.broadcast %cst_22 : f32 to vector<4x512xf32>
    %88 = arith.select %57, %86, %87 : vector<4x512xi1>, vector<4x512xf32>
    %89 = arith.maximumf %85, %88 : vector<4x512xf32>
    %c496_i32 = arith.constant 496 : i32
    %90 = tpu.dynamic_rotate %89 by %c496_i32 dim 1 : vector<4x512xf32>, i32 -> vector<4x512xf32>
    %cst_23 = arith.constant 0.000000e+00 : f32
    %91 = vector.broadcast %cst_23 : f32 to vector<4x512xf32>
    %92 = arith.select %61, %90, %91 : vector<4x512xi1>, vector<4x512xf32>
    %93 = arith.maximumf %89, %92 : vector<4x512xf32>
    %c16_i32_24 = arith.constant 16 : i32
    %94 = tpu.dynamic_rotate %89 by %c16_i32_24 dim 1 : vector<4x512xf32>, i32 -> vector<4x512xf32>
    %cst_25 = arith.constant 0.000000e+00 : f32
    %95 = vector.broadcast %cst_25 : f32 to vector<4x512xf32>
    %96 = arith.select %69, %94, %95 : vector<4x512xi1>, vector<4x512xf32>
    %97 = arith.maximumf %93, %96 : vector<4x512xf32>
    %c480_i32 = arith.constant 480 : i32
    %98 = tpu.dynamic_rotate %89 by %c480_i32 dim 1 : vector<4x512xf32>, i32 -> vector<4x512xf32>
    %cst_26 = arith.constant 0.000000e+00 : f32
    %99 = vector.broadcast %cst_26 : f32 to vector<4x512xf32>
    %100 = arith.select %65, %98, %99 : vector<4x512xi1>, vector<4x512xf32>
    %101 = arith.maximumf %97, %100 : vector<4x512xf32>
    %c32_i32_27 = arith.constant 32 : i32
    %102 = tpu.dynamic_rotate %89 by %c32_i32_27 dim 1 : vector<4x512xf32>, i32 -> vector<4x512xf32>
    %cst_28 = arith.constant 0.000000e+00 : f32
    %103 = vector.broadcast %cst_28 : f32 to vector<4x512xf32>
    %104 = arith.select %73, %102, %103 : vector<4x512xi1>, vector<4x512xf32>
    %105 = arith.maximumf %101, %104 : vector<4x512xf32>
    %c511_i32_29 = arith.constant 511 : i32
    %106 = tpu.dynamic_rotate %105 by %c511_i32_29 dim 1 : vector<4x512xf32>, i32 -> vector<4x512xf32>
    %cst_30 = arith.constant 0.000000e+00 : f32
    %107 = vector.broadcast %cst_30 : f32 to vector<4x512xf32>
    %108 = arith.select %45, %106, %107 : vector<4x512xi1>, vector<4x512xf32>
    %109 = arith.maximumf %105, %108 : vector<4x512xf32>
    %c1_i32_31 = arith.constant 1 : i32
    %110 = tpu.dynamic_rotate %105 by %c1_i32_31 dim 1 : vector<4x512xf32>, i32 -> vector<4x512xf32>
    %cst_32 = arith.constant 0.000000e+00 : f32
    %111 = vector.broadcast %cst_32 : f32 to vector<4x512xf32>
    %112 = arith.select %53, %110, %111 : vector<4x512xi1>, vector<4x512xf32>
    %113 = arith.maximumf %109, %112 : vector<4x512xf32>
    %c510_i32_33 = arith.constant 510 : i32
    %114 = tpu.dynamic_rotate %105 by %c510_i32_33 dim 1 : vector<4x512xf32>, i32 -> vector<4x512xf32>
    %cst_34 = arith.constant 0.000000e+00 : f32
    %115 = vector.broadcast %cst_34 : f32 to vector<4x512xf32>
    %116 = arith.select %49, %114, %115 : vector<4x512xi1>, vector<4x512xf32>
    %117 = arith.maximumf %113, %116 : vector<4x512xf32>
    %c2_i32_35 = arith.constant 2 : i32
    %118 = tpu.dynamic_rotate %105 by %c2_i32_35 dim 1 : vector<4x512xf32>, i32 -> vector<4x512xf32>
    %cst_36 = arith.constant 0.000000e+00 : f32
    %119 = vector.broadcast %cst_36 : f32 to vector<4x512xf32>
    %120 = arith.select %57, %118, %119 : vector<4x512xi1>, vector<4x512xf32>
    %121 = arith.maximumf %117, %120 : vector<4x512xf32>
    %c496_i32_37 = arith.constant 496 : i32
    %122 = tpu.dynamic_rotate %121 by %c496_i32_37 dim 1 : vector<4x512xf32>, i32 -> vector<4x512xf32>
    %cst_38 = arith.constant 0.000000e+00 : f32
    %123 = vector.broadcast %cst_38 : f32 to vector<4x512xf32>
    %124 = arith.select %61, %122, %123 : vector<4x512xi1>, vector<4x512xf32>
    %125 = arith.maximumf %121, %124 : vector<4x512xf32>
    %c16_i32_39 = arith.constant 16 : i32
    %126 = tpu.dynamic_rotate %121 by %c16_i32_39 dim 1 : vector<4x512xf32>, i32 -> vector<4x512xf32>
    %cst_40 = arith.constant 0.000000e+00 : f32
    %127 = vector.broadcast %cst_40 : f32 to vector<4x512xf32>
    %128 = arith.select %69, %126, %127 : vector<4x512xi1>, vector<4x512xf32>
    %129 = arith.maximumf %125, %128 : vector<4x512xf32>
    %c480_i32_41 = arith.constant 480 : i32
    %130 = tpu.dynamic_rotate %121 by %c480_i32_41 dim 1 : vector<4x512xf32>, i32 -> vector<4x512xf32>
    %cst_42 = arith.constant 0.000000e+00 : f32
    %131 = vector.broadcast %cst_42 : f32 to vector<4x512xf32>
    %132 = arith.select %65, %130, %131 : vector<4x512xi1>, vector<4x512xf32>
    %133 = arith.maximumf %129, %132 : vector<4x512xf32>
    %c32_i32_43 = arith.constant 32 : i32
    %134 = tpu.dynamic_rotate %121 by %c32_i32_43 dim 1 : vector<4x512xf32>, i32 -> vector<4x512xf32>
    %cst_44 = arith.constant 0.000000e+00 : f32
    %135 = vector.broadcast %cst_44 : f32 to vector<4x512xf32>
    %136 = arith.select %73, %134, %135 : vector<4x512xi1>, vector<4x512xf32>
    %137 = arith.maximumf %133, %136 : vector<4x512xf32>
    %c511_i32_45 = arith.constant 511 : i32
    %138 = tpu.dynamic_rotate %137 by %c511_i32_45 dim 1 : vector<4x512xf32>, i32 -> vector<4x512xf32>
    %cst_46 = arith.constant 0.000000e+00 : f32
    %139 = vector.broadcast %cst_46 : f32 to vector<4x512xf32>
    %140 = arith.select %45, %138, %139 : vector<4x512xi1>, vector<4x512xf32>
    %141 = arith.maximumf %137, %140 : vector<4x512xf32>
    %c1_i32_47 = arith.constant 1 : i32
    %142 = tpu.dynamic_rotate %137 by %c1_i32_47 dim 1 : vector<4x512xf32>, i32 -> vector<4x512xf32>
    %cst_48 = arith.constant 0.000000e+00 : f32
    %143 = vector.broadcast %cst_48 : f32 to vector<4x512xf32>
    %144 = arith.select %53, %142, %143 : vector<4x512xi1>, vector<4x512xf32>
    %145 = arith.maximumf %141, %144 : vector<4x512xf32>
    %c510_i32_49 = arith.constant 510 : i32
    %146 = tpu.dynamic_rotate %137 by %c510_i32_49 dim 1 : vector<4x512xf32>, i32 -> vector<4x512xf32>
    %cst_50 = arith.constant 0.000000e+00 : f32
    %147 = vector.broadcast %cst_50 : f32 to vector<4x512xf32>
    %148 = arith.select %49, %146, %147 : vector<4x512xi1>, vector<4x512xf32>
    %149 = arith.maximumf %145, %148 : vector<4x512xf32>
    %c2_i32_51 = arith.constant 2 : i32
    %150 = tpu.dynamic_rotate %137 by %c2_i32_51 dim 1 : vector<4x512xf32>, i32 -> vector<4x512xf32>
    %cst_52 = arith.constant 0.000000e+00 : f32
    %151 = vector.broadcast %cst_52 : f32 to vector<4x512xf32>
    %152 = arith.select %57, %150, %151 : vector<4x512xi1>, vector<4x512xf32>
    %153 = arith.maximumf %149, %152 : vector<4x512xf32>
    %c496_i32_53 = arith.constant 496 : i32
    %154 = tpu.dynamic_rotate %153 by %c496_i32_53 dim 1 : vector<4x512xf32>, i32 -> vector<4x512xf32>
    %cst_54 = arith.constant 0.000000e+00 : f32
    %155 = vector.broadcast %cst_54 : f32 to vector<4x512xf32>
    %156 = arith.select %61, %154, %155 : vector<4x512xi1>, vector<4x512xf32>
    %157 = arith.maximumf %153, %156 : vector<4x512xf32>
    %c16_i32_55 = arith.constant 16 : i32
    %158 = tpu.dynamic_rotate %153 by %c16_i32_55 dim 1 : vector<4x512xf32>, i32 -> vector<4x512xf32>
    %cst_56 = arith.constant 0.000000e+00 : f32
    %159 = vector.broadcast %cst_56 : f32 to vector<4x512xf32>
    %160 = arith.select %69, %158, %159 : vector<4x512xi1>, vector<4x512xf32>
    %161 = arith.maximumf %157, %160 : vector<4x512xf32>
    %c480_i32_57 = arith.constant 480 : i32
    %162 = tpu.dynamic_rotate %153 by %c480_i32_57 dim 1 : vector<4x512xf32>, i32 -> vector<4x512xf32>
    %cst_58 = arith.constant 0.000000e+00 : f32
    %163 = vector.broadcast %cst_58 : f32 to vector<4x512xf32>
    %164 = arith.select %65, %162, %163 : vector<4x512xi1>, vector<4x512xf32>
    %165 = arith.maximumf %161, %164 : vector<4x512xf32>
    %c32_i32_59 = arith.constant 32 : i32
    %166 = tpu.dynamic_rotate %153 by %c32_i32_59 dim 1 : vector<4x512xf32>, i32 -> vector<4x512xf32>
    %cst_60 = arith.constant 0.000000e+00 : f32
    %167 = vector.broadcast %cst_60 : f32 to vector<4x512xf32>
    %168 = arith.select %73, %166, %167 : vector<4x512xi1>, vector<4x512xf32>
    %169 = arith.maximumf %165, %168 : vector<4x512xf32>
    %c0_61 = arith.constant 0 : index
    %c0_62 = arith.constant 0 : index
    %c0_63 = arith.constant 0 : index
    %170 = vector.load %arg4[%c0_61, %c0_62, %c0_63] : memref<4x16x4xbf16, #tpu.memory_space<vmem>>, vector<1x16x4xbf16>
    %171 = vector.shape_cast %170 : vector<1x16x4xbf16> to vector<16x4xbf16>
    %172 = arith.truncf %8 : vector<4x512xf32> to vector<4x512xbf16>
    %cst_64 = arith.constant dense<0.000000e+00> : vector<16x512xf32>
    %173 = tpu.matmul %171, %172, %cst_64 {dimension_numbers = #tpu.dot_dimension_numbers<[1], [0], [0], [1], [0, 0, 1, 1], [], []>} : vector<16x4xbf16>, vector<4x512xbf16>, vector<16x512xf32> -> vector<16x512xf32>
    %c1 = arith.constant 1 : index
    %c0_65 = arith.constant 0 : index
    %c0_66 = arith.constant 0 : index
    %174 = vector.load %arg4[%c1, %c0_65, %c0_66] : memref<4x16x4xbf16, #tpu.memory_space<vmem>>, vector<1x16x4xbf16>
    %175 = vector.shape_cast %174 : vector<1x16x4xbf16> to vector<16x4xbf16>
    %176 = arith.truncf %105 : vector<4x512xf32> to vector<4x512xbf16>
    %cst_67 = arith.constant dense<0.000000e+00> : vector<16x512xf32>
    %177 = tpu.matmul %175, %176, %cst_67 {dimension_numbers = #tpu.dot_dimension_numbers<[1], [0], [0], [1], [0, 0, 1, 1], [], []>} : vector<16x4xbf16>, vector<4x512xbf16>, vector<16x512xf32> -> vector<16x512xf32>
    %c2 = arith.constant 2 : index
    %c0_68 = arith.constant 0 : index
    %c0_69 = arith.constant 0 : index
    %178 = vector.load %arg4[%c2, %c0_68, %c0_69] : memref<4x16x4xbf16, #tpu.memory_space<vmem>>, vector<1x16x4xbf16>
    %179 = vector.shape_cast %178 : vector<1x16x4xbf16> to vector<16x4xbf16>
    %180 = arith.truncf %137 : vector<4x512xf32> to vector<4x512xbf16>
    %cst_70 = arith.constant dense<0.000000e+00> : vector<16x512xf32>
    %181 = tpu.matmul %179, %180, %cst_70 {dimension_numbers = #tpu.dot_dimension_numbers<[1], [0], [0], [1], [0, 0, 1, 1], [], []>} : vector<16x4xbf16>, vector<4x512xbf16>, vector<16x512xf32> -> vector<16x512xf32>
    %c3 = arith.constant 3 : index
    %c0_71 = arith.constant 0 : index
    %c0_72 = arith.constant 0 : index
    %182 = vector.load %arg4[%c3, %c0_71, %c0_72] : memref<4x16x4xbf16, #tpu.memory_space<vmem>>, vector<1x16x4xbf16>
    %183 = vector.shape_cast %182 : vector<1x16x4xbf16> to vector<16x4xbf16>
    %184 = arith.truncf %169 : vector<4x512xf32> to vector<4x512xbf16>
    %cst_73 = arith.constant dense<0.000000e+00> : vector<16x512xf32>
    %185 = tpu.matmul %183, %184, %cst_73 {dimension_numbers = #tpu.dot_dimension_numbers<[1], [0], [0], [1], [0, 0, 1, 1], [], []>} : vector<16x4xbf16>, vector<4x512xbf16>, vector<16x512xf32> -> vector<16x512xf32>
    %186 = arith.addf %173, %177 : vector<16x512xf32>
    %187 = arith.addf %181, %185 : vector<16x512xf32>
    %188 = arith.addf %186, %187 : vector<16x512xf32>
    %c0_74 = arith.constant 0 : index
    %c0_75 = arith.constant 0 : index
    %189 = vector.load %arg5[%c0_74, %c0_75] : memref<16x1xf32, #tpu.memory_space<vmem>>, vector<16x1xf32>
    %190 = vector.broadcast %189 : vector<16x1xf32> to vector<16x512xf32>
    %191 = arith.addf %188, %190 : vector<16x512xf32>
    %cst_76 = arith.constant 0.000000e+00 : f32
    %192 = vector.broadcast %cst_76 : f32 to vector<16x512xf32>
    %193 = arith.maximumf %191, %192 : vector<16x512xf32>
    %c0_77 = arith.constant 0 : index
    %c0_78 = arith.constant 0 : index
    %c0_79 = arith.constant 0 : index
    %194 = vector.load %arg6[%c0_77, %c0_78, %c0_79] : memref<1x16x512xf32, #tpu.memory_space<vmem>>, vector<1x16x512xf32>
    %195 = vector.shape_cast %194 : vector<1x16x512xf32> to vector<16x512xf32>
    %196 = vector.shape_cast %193 : vector<16x512xf32> to vector<1x16x512xf32>
    tpu.vector_store %arg6[%c0_77, %c0_78, %c0_79], %196 {strides = array<i32>} : memref<1x16x512xf32, #tpu.memory_space<vmem>>, vector<1x16x512xf32>,
    return
  }
  func.func @transform_0(%arg0: i32) -> (i32, i32, i32) {
    %c0_i32 = arith.constant 0 : i32
    %c0_i32_0 = arith.constant 0 : i32
    %c0_i32_1 = arith.constant 0 : i32
    return %arg0, %c0_i32, %c0_i32_0 : i32, i32, i32
  }
  func.func @transform_1(%arg0: i32) -> (i32, i32) {
    %c0_i32 = arith.constant 0 : i32
    %c0_i32_0 = arith.constant 0 : i32
    %c0_i32_1 = arith.constant 0 : i32
    return %c0_i32, %c0_i32_0 : i32, i32
  }
  func.func @transform_2(%arg0: i32) -> (i32, i32) {
    %c0_i32 = arith.constant 0 : i32
    %c0_i32_0 = arith.constant 0 : i32
    %c0_i32_1 = arith.constant 0 : i32
    return %c0_i32, %c0_i32_0 : i32, i32
  }
  func.func @transform_3(%arg0: i32) -> (i32, i32, i32) {
    %c0_i32 = arith.constant 0 : i32
    %c0_i32_0 = arith.constant 0 : i32
    %c0_i32_1 = arith.constant 0 : i32
    %c0_i32_2 = arith.constant 0 : i32
    return %c0_i32, %c0_i32_0, %c0_i32_1 : i32, i32, i32
  }
  func.func @transform_4(%arg0: i32) -> (i32, i32) {
    %c0_i32 = arith.constant 0 : i32
    %c0_i32_0 = arith.constant 0 : i32
    %c0_i32_1 = arith.constant 0 : i32
    return %c0_i32, %c0_i32_0 : i32, i32
  }
  func.func @transform_5(%arg0: i32) -> (i32, i32, i32) {
    %c0_i32 = arith.constant 0 : i32
    %c0_i32_0 = arith.constant 0 : i32
    %c0_i32_1 = arith.constant 0 : i32
    return %arg0, %c0_i32, %c0_i32_0 : i32, i32, i32
  }
}

</mosaic_0001>

<llo_original>
// kernel: tpu_custom_call.1
$region0: #{tpu_custom_call.1}
  #allocation0 [shape = 'u32[]', space=smem, size = 0x4, offset = 0x4, fixed_abs, tag = 'smem constant byte address 0x4 - core index']
  #allocation1 [shape = 'u32[144,128]{1,0:T(1,128)}', space=vmem, size = 0x12000, scoped, tag = 'internal scratch']
  %s0 = inlined_call_operand.vmem [shape: bf16[1,8,512], index: 0, kind: input, shape index: {}]
  %s1 = inlined_call_operand.vmem [shape: bf16[4,8], index: 1, kind: input, shape index: {}]
  %s2 = inlined_call_operand.vmem [shape: f32[4,1], index: 2, kind: input, shape index: {}]
  %s3 = inlined_call_operand.vmem [shape: bf16[4,16,4], index: 3, kind: input, shape index: {}]
  %s4 = inlined_call_operand.vmem [shape: f32[16,1], index: 4, kind: input, shape index: {}]
  %s5 = inlined_call_operand.hbm [shape: f32[1,16,512], index: 5, kind: output, shape index: {}]
  %s6 = sld [smem:[#allocation0]]
  $region30: #{tpu_custom_call.1} parent=0
    _
  %s8 = ssub.s32 1, %s6
  %s9 = scalar_select 0, %s8, %s6
  $region1: #{tpu_custom_call.1} parent=0
    #allocation2 [shape = 'u8[32768]{0}', space=vmem, size = 0x8000, scoped, tag = 'output window, operand 0, single buffered']
    #allocation3 [shape = 's32[1]{0}', space=sflag, size = 0x4, scoped, tag = 'scoped memory for tpu_custom_call.1']
    %10 = vsyncpa [#allocation3], 0
    // Predicated region
    $region2: #{tpu_custom_call.1} parent=1 // pred_check
      _
    $region3: #{tpu_custom_call.1} parent=1 // pred_check_branch
      %12 = sbr.rel (0) target = $region5
    $region4: #{tpu_custom_call.1} parent=1 // pred_region
      _
    $region5: #{tpu_custom_call.1} parent=1 // pred_fallthru
      _
    // Predicated region
    $region6: #{tpu_custom_call.1} parent=1 // pred_check
      _
    $region7: #{tpu_custom_call.1} parent=1 // pred_check_branch
      %14 = sbr.rel (0) target = $region9
    $region8: #{tpu_custom_call.1} parent=1 // pred_region
      _
    $region9: #{tpu_custom_call.1} parent=1 // pred_fallthru
      _
    // Predicated region
    $region10: #{tpu_custom_call.1} parent=1 // pred_check
      _
    $region11: #{tpu_custom_call.1} parent=1 // pred_check_branch
      %16 = sbr.rel (0) target = $region13
    $region12: #{tpu_custom_call.1} parent=1 // pred_region
      _
    $region13: #{tpu_custom_call.1} parent=1 // pred_fallthru
      _
    // Predicated region
    $region14: #{tpu_custom_call.1} parent=1 // pred_check
      _
    $region15: #{tpu_custom_call.1} parent=1 // pred_check_branch
      %18 = sbr.rel (0) target = $region17
    $region16: #{tpu_custom_call.1} parent=1 // pred_region
      _
    $region17: #{tpu_custom_call.1} parent=1 // pred_fallthru
      _
    // Predicated region
    $region18: #{tpu_custom_call.1} parent=1 // pred_check
      _
    $region19: #{tpu_custom_call.1} parent=1 // pred_check_branch
      %20 = sbr.rel (0) target = $region21
    $region20: #{tpu_custom_call.1} parent=1 // pred_region
      _
    $region21: #{tpu_custom_call.1} parent=1 // pred_fallthru
      _
    %v22 = vld [vmem:[%s0] sm:$0xff]
    %v23 = vld [vmem:[%s0 + $0x8] sm:$0xff]
    %v24 = vld [vmem:[%s1] sm:$0x3]
    %v25 = vld [vmem:[%s2] sm:$0xf]
    %27 = vset.pattern.permute.xlu0 0
    %28 = vperm.xlu0 %27, %v25
    %v29 = vpop.permute.xlu0 %28
    %v33 = vunpack.c.l.b16 %v22
    %v34 = vunpack.c.h.b16 %v22
    %v35 = vunpack.c.l.b16 %v23
    %v36 = vunpack.c.h.b16 %v23
    %v37 = vpack.c.b16 %v33, %v33
    %v38 = vpack.c.b16 %v34, %v34
    %v39 = vpack.c.b16 %v35, %v35
    %v40 = vpack.c.b16 %v36, %v36
    %vm41 = vcmask 64512
    %v43 = vsel %vm41, %v24, 0
    %vm45 = vcmask 1043456
    %v47 = vsel %vm45, %v37, 0
    %v50 = vsel %vm45, %v38, 0
    %v53 = vsel %vm45, %v39, 0
    %v56 = vsel %vm45, %v40, 0
    %58 = vmatprep.subr.bf16.mxu0 %v50
    %59 = vmatpush1.bf16.msra.mxu0 %v47
    %60 = vmatprep.subr.bf16.mxu0 0
    %61 = vmatpush1.bf16.msra.mxu0 0
    %62 = vmatprep.subr.bf16.mxu0 0
    %63 = vmatpush1.bf16.msra.mxu0 0
    %64 = vmatprep.subr.bf16.mxu0 0
    %65 = vmatpush1.bf16.msra.mxu0 0
    %66 = vmatprep.subr.bf16.mxu0 0
    %67 = vmatpush1.bf16.msra.mxu0 0
    %68 = vmatprep.subr.bf16.mxu0 0
    %69 = vmatpush1.bf16.msra.mxu0 0
    %70 = vmatprep.subr.bf16.mxu0 0
    %71 = vmatpush1.bf16.msra.mxu0 0
    %72 = vmatprep.subr.bf16.mxu0 0
    %73 = vmatpush1.bf16.msra.mxu0 0
    %74 = vmatprep.subr.bf16.mxu0 0
    %75 = vmatpush1.bf16.msra.mxu0 0
    %76 = vmatprep.subr.bf16.mxu0 0
    %77 = vmatpush1.bf16.msra.mxu0 0
    %78 = vmatprep.subr.bf16.mxu0 0
    %79 = vmatpush1.bf16.msra.mxu0 0
    %80 = vmatprep.subr.bf16.mxu0 0
    %81 = vmatpush1.bf16.msra.mxu0 0
    %82 = vmatprep.subr.bf16.mxu0 0
    %83 = vmatpush1.bf16.msra.mxu0 0
    %84 = vmatprep.subr.bf16.mxu0 0
    %85 = vmatpush1.bf16.msra.mxu0 0
    %86 = vmatprep.subr.bf16.mxu0 0
    %87 = vmatpush1.bf16.msra.mxu0 0
    %88 = vmatprep.subr.bf16.mxu0 0
    %89 = vmatpush1.bf16.msra.mxu0 0
    %90 = vmatprep.mubr.bf16.mxu0 0
    %91 = vmatmul.mubr.bf16.gmra.mrb[0].mxu0 %v43
    %v92 = vpop.f32.mrb[0].mxu0
    %v93 = vadd.f32 %v29, %v92
    %v94 = vpop.f32.mrb[0].mxu0
    %v95 = vadd.f32 %v29, %v94
    %v96 = vpop.f32.mrb[0].mxu0
    %v97 = vpop.f32.mrb[0].mxu0
    %98 = vdwg.mxu0
    %99 = vmatprep.subr.bf16.mxu0 %v56
    %100 = vmatpush1.bf16.msra.mxu0 %v53
    %101 = vmatprep.subr.bf16.mxu0 0
    %102 = vmatpush1.bf16.msra.mxu0 0
    %103 = vmatprep.subr.bf16.mxu0 0
    %104 = vmatpush1.bf16.msra.mxu0 0
    %105 = vmatprep.subr.bf16.mxu0 0
    %106 = vmatpush1.bf16.msra.mxu0 0
    %107 = vmatprep.subr.bf16.mxu0 0
    %108 = vmatpush1.bf16.msra.mxu0 0
    %109 = vmatprep.subr.bf16.mxu0 0
    %110 = vmatpush1.bf16.msra.mxu0 0
    %111 = vmatprep.subr.bf16.mxu0 0
    %112 = vmatpush1.bf16.msra.mxu0 0
    %113 = vmatprep.subr.bf16.mxu0 0
    %114 = vmatpush1.bf16.msra.mxu0 0
    %115 = vmatprep.subr.bf16.mxu0 0
    %116 = vmatpush1.bf16.msra.mxu0 0
    %117 = vmatprep.subr.bf16.mxu0 0
    %118 = vmatpush1.bf16.msra.mxu0 0
    %119 = vmatprep.subr.bf16.mxu0 0
    %120 = vmatpush1.bf16.msra.mxu0 0
    %121 = vmatprep.subr.bf16.mxu0 0
    %122 = vmatpush1.bf16.msra.mxu0 0
    %123 = vmatprep.subr.bf16.mxu0 0
    %124 = vmatpush1.bf16.msra.mxu0 0
    %125 = vmatprep.subr.bf16.mxu0 0
    %126 = vmatpush1.bf16.msra.mxu0 0
    %127 = vmatprep.subr.bf16.mxu0 0
    %128 = vmatpush1.bf16.msra.mxu0 0
    %129 = vmatprep.subr.bf16.mxu0 0
    %130 = vmatpush1.bf16.msra.mxu0 0
    %131 = vmatprep.mubr.bf16.mxu0 0
    %132 = vmatmul.mubr.bf16.gmra.mrb[0].mxu0 %v43
    %v133 = vpop.f32.mrb[0].mxu0
    %v134 = vadd.f32 %v29, %v133
    %v135 = vpop.f32.mrb[0].mxu0
    %v136 = vadd.f32 %v29, %v135
    %v137 = vpop.f32.mrb[0].mxu0
    %v138 = vpop.f32.mrb[0].mxu0
    %139 = vdwg.mxu0
    %v140 = vmax.f32 %v93, 0.0
    %v141 = vmax.f32 %v95, 0.0
    %v142 = vmax.f32 %v134, 0.0
    %v143 = vmax.f32 %v136, 0.0
    %v144 = vlaneseq
    %v145 = vand.u32 %v144, 127
    %v146 = vadd.s32 %v145, 128
    %v147 = vadd.s32 %v145, 256
    %v148 = vadd.s32 %v145, 384
    %vm149 = vcmp.lt.s32.totalorder %v145, 0
    %v150 = vsub.s32 0, %v145
    %v151 = vsel %vm149, %v150, %v145
    %v152 = vshrl.u32 %v151, 8
    %v153 = vand.u32 %v151, 255
    %v154 = vsub.s32 0, %v153
    %v155 = vsel %vm149, %v154, %v153
    %vm156 = vcmp.lt.s32.totalorder %v146, 0
    %v157 = vsub.s32 0, %v146
    %v158 = vsel %vm156, %v157, %v146
    %v159 = vshrl.u32 %v158, 8
    %v160 = vand.u32 %v158, 255
    %v161 = vsub.s32 0, %v160
    %v162 = vsel %vm156, %v161, %v160
    %vm163 = vcmp.lt.s32.totalorder %v147, 0
    %v164 = vsub.s32 0, %v147
    %v165 = vsel %vm163, %v164, %v147
    %v166 = vshrl.u32 %v165, 8
    %v167 = vand.u32 %v165, 255
    %v168 = vsub.s32 0, %v167
    %v169 = vsel %vm163, %v168, %v167
    %vm170 = vcmp.lt.s32.totalorder %v148, 0
    %v171 = vsub.s32 0, %v148
    %v172 = vsel %vm170, %v171, %v148
    %v173 = vshrl.u32 %v172, 8
    %v174 = vand.u32 %v172, 255
    %v175 = vsub.s32 0, %v174
    %v176 = vsel %vm170, %v175, %v174
    %vm177 = vcmp.ne.s32.totalorder %v155, 0
    %vm178 = vcmp.ne.s32.totalorder %v162, 0
    %vm179 = vcmp.ne.s32.totalorder %v169, 0
    %vm180 = vcmp.ne.s32.totalorder %v176, 0
    %vm181 = vcmp.lt.s32.totalorder %v155, 0
    %vm182 = vcmp.lt.s32.totalorder %v162, 0
    %vm183 = vcmp.lt.s32.totalorder %v169, 0
    %vm184 = vcmp.lt.s32.totalorder %v176, 0
    %vm185 = vmand %vm181, %vm177
    %vm186 = vmand %vm182, %vm178
    %vm187 = vmand %vm183, %vm179
    %vm188 = vmand %vm184, %vm180
    %v189 = vadd.s32 %v155, 256
    %v190 = vadd.s32 %v162, 256
    %v191 = vadd.s32 %v169, 256
    %v192 = vadd.s32 %v176, 256
    %v193 = vsel %vm185, %v189, %v155
    %v194 = vsel %vm186, %v190, %v162
    %v195 = vsel %vm187, %v191, %v169
    %v196 = vsel %vm188, %v192, %v176
    %vm197 = vcmp.lt.s32.totalorder %v193, 0
    %v198 = vsub.s32 0, %v193
    %v199 = vsel %vm197, %v198, %v193
    %v200 = vshrl.u32 %v199, 4
    %v201 = vand.u32 %v199, 15
    %v202 = vsub.s32 0, %v201
    %v203 = vsel %vm197, %v202, %v201
    %vm204 = vcmp.lt.s32.totalorder %v194, 0
    %v205 = vsub.s32 0, %v194
    %v206 = vsel %vm204, %v205, %v194
    %v207 = vshrl.u32 %v206, 4
    %v208 = vand.u32 %v206, 15
    %v209 = vsub.s32 0, %v208
    %v210 = vsel %vm204, %v209, %v208
    %vm211 = vcmp.lt.s32.totalorder %v195, 0
    %v212 = vsub.s32 0, %v195
    %v213 = vsel %vm211, %v212, %v195
    %v214 = vshrl.u32 %v213, 4
    %v215 = vand.u32 %v213, 15
    %v216 = vsub.s32 0, %v215
    %v217 = vsel %vm211, %v216, %v215
    %vm218 = vcmp.lt.s32.totalorder %v196, 0
    %v219 = vsub.s32 0, %v196
    %v220 = vsel %vm218, %v219, %v196
    %v221 = vshrl.u32 %v220, 4
    %v222 = vand.u32 %v220, 15
    %v223 = vsub.s32 0, %v222
    %v224 = vsel %vm218, %v223, %v222
    %vm225 = vcmp.ne.s32.totalorder %v203, 0
    %vm226 = vcmp.ne.s32.totalorder %v210, 0
    %vm227 = vcmp.ne.s32.totalorder %v217, 0
    %vm228 = vcmp.ne.s32.totalorder %v224, 0
    %vm229 = vcmp.lt.s32.totalorder %v203, 0
    %vm230 = vcmp.lt.s32.totalorder %v210, 0
    %vm231 = vcmp.lt.s32.totalorder %v217, 0
    %vm232 = vcmp.lt.s32.totalorder %v224, 0
    %vm233 = vmand %vm229, %vm225
    %vm234 = vmand %vm230, %vm226
    %vm235 = vmand %vm231, %vm227
    %vm236 = vmand %vm232, %vm228
    %v237 = vadd.s32 %v203, 16
    %v238 = vadd.s32 %v210, 16
    %v239 = vadd.s32 %v217, 16
    %v240 = vadd.s32 %v224, 16
    %v241 = vsel %vm233, %v237, %v203
    %v242 = vsel %vm234, %v238, %v210
    %v243 = vsel %vm235, %v239, %v217
    %v244 = vsel %vm236, %v240, %v224
    %vm245 = vcmp.lt.s32.totalorder %v241, 15
    %vm246 = vcmp.lt.s32.totalorder %v242, 15
    %vm247 = vcmp.lt.s32.totalorder %v243, 15
    %vm248 = vcmp.lt.s32.totalorder %v244, 15
    %v249 = vsel %vm245, 1, 0
    %v250 = vsel %vm246, 1, 0
    %v251 = vsel %vm247, 1, 0
    %v252 = vsel %vm248, 1, 0
    %vm253 = vcmp.eq.s32.totalorder %v249, 1
    %vm254 = vcmp.eq.s32.totalorder %v250, 1
    %vm255 = vcmp.eq.s32.totalorder %v251, 1
    %vm256 = vcmp.eq.s32.totalorder %v252, 1
    %vm257 = vcmp.lt.s32.totalorder %v241, 14
    %vm258 = vcmp.lt.s32.totalorder %v242, 14
    %vm259 = vcmp.lt.s32.totalorder %v243, 14
    %vm260 = vcmp.lt.s32.totalorder %v244, 14
    %v261 = vsel %vm257, 1, 0
    %v262 = vsel %vm258, 1, 0
    %v263 = vsel %vm259, 1, 0
    %v264 = vsel %vm260, 1, 0
    %vm265 = vcmp.eq.s32.totalorder %v261, 1
    %vm266 = vcmp.eq.s32.totalorder %v262, 1
    %vm267 = vcmp.eq.s32.totalorder %v263, 1
    %vm268 = vcmp.eq.s32.totalorder %v264, 1
    %vm269 = vcmp.ge.s32.totalorder %v241, 1
    %vm270 = vcmp.ge.s32.totalorder %v242, 1
    %vm271 = vcmp.ge.s32.totalorder %v243, 1
    %vm272 = vcmp.ge.s32.totalorder %v244, 1
    %v273 = vsel %vm269, 1, 0
    %v274 = vsel %vm270, 1, 0
    %v275 = vsel %vm271, 1, 0
    %v276 = vsel %vm272, 1, 0
    %vm277 = vcmp.eq.s32.totalorder %v273, 1
    %vm278 = vcmp.eq.s32.totalorder %v274, 1
    %vm279 = vcmp.eq.s32.totalorder %v275, 1
    %vm280 = vcmp.eq.s32.totalorder %v276, 1
    %vm281 = vcmp.ge.s32.totalorder %v241, 2
    %vm282 = vcmp.ge.s32.totalorder %v242, 2
    %vm283 = vcmp.ge.s32.totalorder %v243, 2
    %vm284 = vcmp.ge.s32.totalorder %v244, 2
    %v285 = vsel %vm281, 1, 0
    %v286 = vsel %vm282, 1, 0
    %v287 = vsel %vm283, 1, 0
    %v288 = vsel %vm284, 1, 0
    %vm289 = vcmp.eq.s32.totalorder %v285, 1
    %vm290 = vcmp.eq.s32.totalorder %v286, 1
    %vm291 = vcmp.eq.s32.totalorder %v287, 1
    %vm292 = vcmp.eq.s32.totalorder %v288, 1
    %vm293 = vcmp.lt.s32.totalorder %v193, 240
    %vm294 = vcmp.lt.s32.totalorder %v194, 240
    %vm295 = vcmp.lt.s32.totalorder %v195, 240
    %vm296 = vcmp.lt.s32.totalorder %v196, 240
    %v297 = vsel %vm293, 1, 0
    %v298 = vsel %vm294, 1, 0
    %v299 = vsel %vm295, 1, 0
    %v300 = vsel %vm296, 1, 0
    %vm301 = vcmp.eq.s32.totalorder %v297, 1
    %vm302 = vcmp.eq.s32.totalorder %v298, 1
    %vm303 = vcmp.eq.s32.totalorder %v299, 1
    %vm304 = vcmp.eq.s32.totalorder %v300, 1
    %vm305 = vcmp.lt.s32.totalorder %v193, 224
    %vm306 = vcmp.lt.s32.totalorder %v194, 224
    %vm307 = vcmp.lt.s32.totalorder %v195, 224
    %vm308 = vcmp.lt.s32.totalorder %v196, 224
    %v309 = vsel %vm305, 1, 0
    %v310 = vsel %vm306, 1, 0
    %v311 = vsel %vm307, 1, 0
    %v312 = vsel %vm308, 1, 0
    %vm313 = vcmp.eq.s32.totalorder %v309, 1
    %vm314 = vcmp.eq.s32.totalorder %v310, 1
    %vm315 = vcmp.eq.s32.totalorder %v311, 1
    %vm316 = vcmp.eq.s32.totalorder %v312, 1
    %vm317 = vcmp.ge.s32.totalorder %v193, 16
    %vm318 = vcmp.ge.s32.totalorder %v194, 16
    %vm319 = vcmp.ge.s32.totalorder %v195, 16
    %vm320 = vcmp.ge.s32.totalorder %v196, 16
    %v321 = vsel %vm317, 1, 0
    %v322 = vsel %vm318, 1, 0
    %v323 = vsel %vm319, 1, 0
    %v324 = vsel %vm320, 1, 0
    %vm325 = vcmp.eq.s32.totalorder %v321, 1
    %vm326 = vcmp.eq.s32.totalorder %v322, 1
    %vm327 = vcmp.eq.s32.totalorder %v323, 1
    %vm328 = vcmp.eq.s32.totalorder %v324, 1
    %vm329 = vcmp.ge.s32.totalorder %v193, 32
    %vm330 = vcmp.ge.s32.totalorder %v194, 32
    %vm331 = vcmp.ge.s32.totalorder %v195, 32
    %vm332 = vcmp.ge.s32.totalorder %v196, 32
    %v333 = vsel %vm329, 1, 0
    %v334 = vsel %vm330, 1, 0
    %v335 = vsel %vm331, 1, 0
    %v336 = vsel %vm332, 1, 0
    %vm337 = vcmp.eq.s32.totalorder %v333, 1
    %vm338 = vcmp.eq.s32.totalorder %v334, 1
    %vm339 = vcmp.eq.s32.totalorder %v335, 1
    %vm340 = vcmp.eq.s32.totalorder %v336, 1
    %341 = vrot.lane.b32.xlu0 %v140, 127
    %v342 = vpop.permute.xlu0 %341
    %343 = vrot.lane.b32.xlu0 %v141, 127
    %v344 = vpop.permute.xlu0 %343
    %345 = vrot.lane.b32.xlu0 %v142, 127
    %v346 = vpop.permute.xlu0 %345
    %347 = vrot.lane.b32.xlu0 %v143, 127
    %v348 = vpop.permute.xlu0 %347
    %vm349 = vcmp.lt.s32.totalorder %v145, 127
    %v350 = vsel %vm349, %v346, %v348
    %v351 = vsel %vm349, %v344, %v346
    %v352 = vsel %vm349, %v342, %v344
    %v353 = vsel %vm349, %v348, %v342
    %v354 = vsel %vm253, %v352, 0.0
    %v355 = vsel %vm254, %v351, 0.0
    %v356 = vsel %vm255, %v350, 0.0
    %v357 = vsel %vm256, %v353, 0.0
    %v358 = vmax.f32 %v140, %v354
    %v359 = vmax.f32 %v141, %v355
    %v360 = vmax.f32 %v142, %v356
    %v361 = vmax.f32 %v143, %v357
    %362 = vrot.lane.b32.xlu0 %v140, 1
    %v363 = vpop.permute.xlu0 %362
    %364 = vrot.lane.b32.xlu0 %v141, 1
    %v365 = vpop.permute.xlu0 %364
    %366 = vrot.lane.b32.xlu0 %v142, 1
    %v367 = vpop.permute.xlu0 %366
    %368 = vrot.lane.b32.xlu0 %v143, 1
    %v369 = vpop.permute.xlu0 %368
    %vm370 = vcmp.lt.s32.totalorder %v145, 1
    %v371 = vsel %vm370, %v367, %v369
    %v372 = vsel %vm370, %v365, %v367
    %v373 = vsel %vm370, %v363, %v365
    %v374 = vsel %vm370, %v369, %v363
    %v375 = vsel %vm277, %v374, 0.0
    %v376 = vsel %vm278, %v373, 0.0
    %v377 = vsel %vm279, %v372, 0.0
    %v378 = vsel %vm280, %v371, 0.0
    %v379 = vmax.f32 %v358, %v375
    %v380 = vmax.f32 %v359, %v376
    %v381 = vmax.f32 %v360, %v377
    %v382 = vmax.f32 %v361, %v378
    %383 = vrot.lane.b32.xlu0 %v140, 126
    %v384 = vpop.permute.xlu0 %383
    %385 = vrot.lane.b32.xlu0 %v141, 126
    %v386 = vpop.permute.xlu0 %385
    %387 = vrot.lane.b32.xlu0 %v142, 126
    %v388 = vpop.permute.xlu0 %387
    %389 = vrot.lane.b32.xlu0 %v143, 126
    %v390 = vpop.permute.xlu0 %389
    %vm391 = vcmp.lt.s32.totalorder %v145, 126
    %v392 = vsel %vm391, %v388, %v390
    %v393 = vsel %vm391, %v386, %v388
    %v394 = vsel %vm391, %v384, %v386
    %v395 = vsel %vm391, %v390, %v384
    %v396 = vsel %vm265, %v394, 0.0
    %v397 = vsel %vm266, %v393, 0.0
    %v398 = vsel %vm267, %v392, 0.0
    %v399 = vsel %vm268, %v395, 0.0
    %v400 = vmax.f32 %v379, %v396
    %v401 = vmax.f32 %v380, %v397
    %v402 = vmax.f32 %v381, %v398
    %v403 = vmax.f32 %v382, %v399
    %404 = vrot.lane.b32.xlu0 %v140, 2
    %v405 = vpop.permute.xlu0 %404
    %406 = vrot.lane.b32.xlu0 %v141, 2
    %v407 = vpop.permute.xlu0 %406
    %408 = vrot.lane.b32.xlu0 %v142, 2
    %v409 = vpop.permute.xlu0 %408
    %410 = vrot.lane.b32.xlu0 %v143, 2
    %v411 = vpop.permute.xlu0 %410
    %vm412 = vcmp.lt.s32.totalorder %v145, 2
    %v413 = vsel %vm412, %v409, %v411
    %v414 = vsel %vm412, %v407, %v409
    %v415 = vsel %vm412, %v405, %v407
    %v416 = vsel %vm412, %v411, %v405
    %v417 = vsel %vm289, %v416, 0.0
    %v418 = vsel %vm290, %v415, 0.0
    %v419 = vsel %vm291, %v414, 0.0
    %v420 = vsel %vm292, %v413, 0.0
    %v421 = vmax.f32 %v400, %v417
    %v422 = vmax.f32 %v401, %v418
    %v423 = vmax.f32 %v402, %v419
    %v424 = vmax.f32 %v403, %v420
    %425 = vrot.lane.b32.xlu0 %v421, 112
    %v426 = vpop.permute.xlu0 %425
    %427 = vrot.lane.b32.xlu0 %v422, 112
    %v428 = vpop.permute.xlu0 %427
    %429 = vrot.lane.b32.xlu0 %v423, 112
    %v430 = vpop.permute.xlu0 %429
    %431 = vrot.lane.b32.xlu0 %v424, 112
    %v432 = vpop.permute.xlu0 %431
    %vm433 = vcmp.lt.s32.totalorder %v145, 112
    %v434 = vsel %vm433, %v430, %v432
    %v435 = vsel %vm433, %v428, %v430
    %v436 = vsel %vm433, %v426, %v428
    %v437 = vsel %vm433, %v432, %v426
    %v438 = vsel %vm301, %v436, 0.0
    %v439 = vsel %vm302, %v435, 0.0
    %v440 = vsel %vm303, %v434, 0.0
    %v441 = vsel %vm304, %v437, 0.0
    %v442 = vmax.f32 %v421, %v438
    %v443 = vmax.f32 %v422, %v439
    %v444 = vmax.f32 %v423, %v440
    %v445 = vmax.f32 %v424, %v441
    %446 = vrot.lane.b32.xlu0 %v421, 16
    %v447 = vpop.permute.xlu0 %446
    %448 = vrot.lane.b32.xlu0 %v422, 16
    %v449 = vpop.permute.xlu0 %448
    %450 = vrot.lane.b32.xlu0 %v423, 16
    %v451 = vpop.permute.xlu0 %450
    %452 = vrot.lane.b32.xlu0 %v424, 16
    %v453 = vpop.permute.xlu0 %452
    %vm454 = vcmp.lt.s32.totalorder %v145, 16
    %v455 = vsel %vm454, %v451, %v453
    %v456 = vsel %vm454, %v449, %v451
    %v457 = vsel %vm454, %v447, %v449
    %v458 = vsel %vm454, %v453, %v447
    %v459 = vsel %vm325, %v458, 0.0
    %v460 = vsel %vm326, %v457, 0.0
    %v461 = vsel %vm327, %v456, 0.0
    %v462 = vsel %vm328, %v455, 0.0
    %v463 = vmax.f32 %v442, %v459
    %v464 = vmax.f32 %v443, %v460
    %v465 = vmax.f32 %v444, %v461
    %v466 = vmax.f32 %v445, %v462
    %467 = vrot.lane.b32.xlu0 %v421, 96
    %v468 = vpop.permute.xlu0 %467
    %469 = vrot.lane.b32.xlu0 %v422, 96
    %v470 = vpop.permute.xlu0 %469
    %471 = vrot.lane.b32.xlu0 %v423, 96
    %v472 = vpop.permute.xlu0 %471
    %473 = vrot.lane.b32.xlu0 %v424, 96
    %v474 = vpop.permute.xlu0 %473
    %vm475 = vcmp.lt.s32.totalorder %v145, 96
    %v476 = vsel %vm475, %v472, %v474
    %v477 = vsel %vm475, %v470, %v472
    %v478 = vsel %vm475, %v468, %v470
    %v479 = vsel %vm475, %v474, %v468
    %v480 = vsel %vm313, %v478, 0.0
    %v481 = vsel %vm314, %v477, 0.0
    %v482 = vsel %vm315, %v476, 0.0
    %v483 = vsel %vm316, %v479, 0.0
    %v484 = vmax.f32 %v463, %v480
    %v485 = vmax.f32 %v464, %v481
    %v486 = vmax.f32 %v465, %v482
    %v487 = vmax.f32 %v466, %v483
    %488 = vrot.lane.b32.xlu0 %v421, 32
    %v489 = vpop.permute.xlu0 %488
    %490 = vrot.lane.b32.xlu0 %v422, 32
    %v491 = vpop.permute.xlu0 %490
    %492 = vrot.lane.b32.xlu0 %v423, 32
    %v493 = vpop.permute.xlu0 %492
    %494 = vrot.lane.b32.xlu0 %v424, 32
    %v495 = vpop.permute.xlu0 %494
    %vm496 = vcmp.lt.s32.totalorder %v145, 32
    %v497 = vsel %vm496, %v493, %v495
    %v498 = vsel %vm496, %v491, %v493
    %v499 = vsel %vm496, %v489, %v491
    %v500 = vsel %vm496, %v495, %v489
    %v501 = vsel %vm337, %v500, 0.0
    %v502 = vsel %vm338, %v499, 0.0
    %v503 = vsel %vm339, %v498, 0.0
    %v504 = vsel %vm340, %v497, 0.0
    %v505 = vmax.f32 %v484, %v501
    %v506 = vmax.f32 %v485, %v502
    %v507 = vmax.f32 %v486, %v503
    %v508 = vmax.f32 %v487, %v504
    %509 = vrot.lane.b32.xlu0 %v505, 127
    %v510 = vpop.permute.xlu0 %509
    %511 = vrot.lane.b32.xlu0 %v506, 127
    %v512 = vpop.permute.xlu0 %511
    %513 = vrot.lane.b32.xlu0 %v507, 127
    %v514 = vpop.permute.xlu0 %513
    %515 = vrot.lane.b32.xlu0 %v508, 127
    %v516 = vpop.permute.xlu0 %515
    %v517 = vsel %vm349, %v514, %v516
    %v518 = vsel %vm349, %v512, %v514
    %v519 = vsel %vm349, %v510, %v512
    %v520 = vsel %vm349, %v516, %v510
    %v521 = vsel %vm253, %v519, 0.0
    %v522 = vsel %vm254, %v518, 0.0
    %v523 = vsel %vm255, %v517, 0.0
    %v524 = vsel %vm256, %v520, 0.0
    %v525 = vmax.f32 %v505, %v521
    %v526 = vmax.f32 %v506, %v522
    %v527 = vmax.f32 %v507, %v523
    %v528 = vmax.f32 %v508, %v524
    %529 = vrot.lane.b32.xlu0 %v505, 1
    %v530 = vpop.permute.xlu0 %529
    %531 = vrot.lane.b32.xlu0 %v506, 1
    %v532 = vpop.permute.xlu0 %531
    %533 = vrot.lane.b32.xlu0 %v507, 1
    %v534 = vpop.permute.xlu0 %533
    %535 = vrot.lane.b32.xlu0 %v508, 1
    %v536 = vpop.permute.xlu0 %535
    %v537 = vsel %vm370, %v534, %v536
    %v538 = vsel %vm370, %v532, %v534
    %v539 = vsel %vm370, %v530, %v532
    %v540 = vsel %vm370, %v536, %v530
    %v541 = vsel %vm277, %v540, 0.0
    %v542 = vsel %vm278, %v539, 0.0
    %v543 = vsel %vm279, %v538, 0.0
    %v544 = vsel %vm280, %v537, 0.0
    %v545 = vmax.f32 %v525, %v541
    %v546 = vmax.f32 %v526, %v542
    %v547 = vmax.f32 %v527, %v543
    %v548 = vmax.f32 %v528, %v544
    %549 = vrot.lane.b32.xlu0 %v505, 126
    %v550 = vpop.permute.xlu0 %549
    %551 = vrot.lane.b32.xlu0 %v506, 126
    %v552 = vpop.permute.xlu0 %551
    %553 = vrot.lane.b32.xlu0 %v507, 126
    %v554 = vpop.permute.xlu0 %553
    %555 = vrot.lane.b32.xlu0 %v508, 126
    %v556 = vpop.permute.xlu0 %555
    %v557 = vsel %vm391, %v554, %v556
    %v558 = vsel %vm391, %v552, %v554
    %v559 = vsel %vm391, %v550, %v552
    %v560 = vsel %vm391, %v556, %v550
    %v561 = vsel %vm265, %v559, 0.0
    %v562 = vsel %vm266, %v558, 0.0
    %v563 = vsel %vm267, %v557, 0.0
    %v564 = vsel %vm268, %v560, 0.0
    %v565 = vmax.f32 %v545, %v561
    %v566 = vmax.f32 %v546, %v562
    %v567 = vmax.f32 %v547, %v563
    %v568 = vmax.f32 %v548, %v564
    %569 = vrot.lane.b32.xlu0 %v505, 2
    %v570 = vpop.permute.xlu0 %569
    %571 = vrot.lane.b32.xlu0 %v506, 2
    %v572 = vpop.permute.xlu0 %571
    %573 = vrot.lane.b32.xlu0 %v507, 2
    %v574 = vpop.permute.xlu0 %573
    %575 = vrot.lane.b32.xlu0 %v508, 2
    %v576 = vpop.permute.xlu0 %575
    %v577 = vsel %vm412, %v574, %v576
    %v578 = vsel %vm412, %v572, %v574
    %v579 = vsel %vm412, %v570, %v572
    %v580 = vsel %vm412, %v576, %v570
    %v581 = vsel %vm289, %v580, 0.0
    %v582 = vsel %vm290, %v579, 0.0
    %v583 = vsel %vm291, %v578, 0.0
    %v584 = vsel %vm292, %v577, 0.0
    %v585 = vmax.f32 %v565, %v581
    %v586 = vmax.f32 %v566, %v582
    %v587 = vmax.f32 %v567, %v583
    %v588 = vmax.f32 %v568, %v584
    %589 = vrot.lane.b32.xlu0 %v585, 112
    %v590 = vpop.permute.xlu0 %589
    %591 = vrot.lane.b32.xlu0 %v586, 112
    %v592 = vpop.permute.xlu0 %591
    %593 = vrot.lane.b32.xlu0 %v587, 112
    %v594 = vpop.permute.xlu0 %593
    %595 = vrot.lane.b32.xlu0 %v588, 112
    %v596 = vpop.permute.xlu0 %595
    %v597 = vsel %vm433, %v594, %v596
    %v598 = vsel %vm433, %v592, %v594
    %v599 = vsel %vm433, %v590, %v592
    %v600 = vsel %vm433, %v596, %v590
    %v601 = vsel %vm301, %v599, 0.0
    %v602 = vsel %vm302, %v598, 0.0
    %v603 = vsel %vm303, %v597, 0.0
    %v604 = vsel %vm304, %v600, 0.0
    %v605 = vmax.f32 %v585, %v601
    %v606 = vmax.f32 %v586, %v602
    %v607 = vmax.f32 %v587, %v603
    %v608 = vmax.f32 %v588, %v604
    %609 = vrot.lane.b32.xlu0 %v585, 16
    %v610 = vpop.permute.xlu0 %609
    %611 = vrot.lane.b32.xlu0 %v586, 16
    %v612 = vpop.permute.xlu0 %611
    %613 = vrot.lane.b32.xlu0 %v587, 16
    %v614 = vpop.permute.xlu0 %613
    %615 = vrot.lane.b32.xlu0 %v588, 16
    %v616 = vpop.permute.xlu0 %615
    %v617 = vsel %vm454, %v614, %v616
    %v618 = vsel %vm454, %v612, %v614
    %v619 = vsel %vm454, %v610, %v612
    %v620 = vsel %vm454, %v616, %v610
    %v621 = vsel %vm325, %v620, 0.0
    %v622 = vsel %vm326, %v619, 0.0
    %v623 = vsel %vm327, %v618, 0.0
    %v624 = vsel %vm328, %v617, 0.0
    %v625 = vmax.f32 %v605, %v621
    %v626 = vmax.f32 %v606, %v622
    %v627 = vmax.f32 %v607, %v623
    %v628 = vmax.f32 %v608, %v624
    %629 = vrot.lane.b32.xlu0 %v585, 96
    %v630 = vpop.permute.xlu0 %629
    %631 = vrot.lane.b32.xlu0 %v586, 96
    %v632 = vpop.permute.xlu0 %631
    %633 = vrot.lane.b32.xlu0 %v587, 96
    %v634 = vpop.permute.xlu0 %633
    %635 = vrot.lane.b32.xlu0 %v588, 96
    %v636 = vpop.permute.xlu0 %635
    %v637 = vsel %vm475, %v634, %v636
    %v638 = vsel %vm475, %v632, %v634
    %v639 = vsel %vm475, %v630, %v632
    %v640 = vsel %vm475, %v636, %v630
    %v641 = vsel %vm313, %v639, 0.0
    %v642 = vsel %vm314, %v638, 0.0
    %v643 = vsel %vm315, %v637, 0.0
    %v644 = vsel %vm316, %v640, 0.0
    %v645 = vmax.f32 %v625, %v641
    %v646 = vmax.f32 %v626, %v642
    %v647 = vmax.f32 %v627, %v643
    %v648 = vmax.f32 %v628, %v644
    %649 = vrot.lane.b32.xlu0 %v585, 32
    %v650 = vpop.permute.xlu0 %649
    %651 = vrot.lane.b32.xlu0 %v586, 32
    %v652 = vpop.permute.xlu0 %651
    %653 = vrot.lane.b32.xlu0 %v587, 32
    %v654 = vpop.permute.xlu0 %653
    %655 = vrot.lane.b32.xlu0 %v588, 32
    %v656 = vpop.permute.xlu0 %655
    %v657 = vsel %vm496, %v654, %v656
    %v658 = vsel %vm496, %v652, %v654
    %v659 = vsel %vm496, %v650, %v652
    %v660 = vsel %vm496, %v656, %v650
    %v661 = vsel %vm337, %v660, 0.0
    %v662 = vsel %vm338, %v659, 0.0
    %v663 = vsel %vm339, %v658, 0.0
    %v664 = vsel %vm340, %v657, 0.0
    %v665 = vmax.f32 %v645, %v661
    %v666 = vmax.f32 %v646, %v662
    %v667 = vmax.f32 %v647, %v663
    %v668 = vmax.f32 %v648, %v664
    %669 = vrot.lane.b32.xlu0 %v665, 127
    %v670 = vpop.permute.xlu0 %669
    %671 = vrot.lane.b32.xlu0 %v666, 127
    %v672 = vpop.permute.xlu0 %671
    %673 = vrot.lane.b32.xlu0 %v667, 127
    %v674 = vpop.permute.xlu0 %673
    %675 = vrot.lane.b32.xlu0 %v668, 127
    %v676 = vpop.permute.xlu0 %675
    %v677 = vsel %vm349, %v674, %v676
    %v678 = vsel %vm349, %v672, %v674
    %v679 = vsel %vm349, %v670, %v672
    %v680 = vsel %vm349, %v676, %v670
    %v681 = vsel %vm253, %v679, 0.0
    %v682 = vsel %vm254, %v678, 0.0
    %v683 = vsel %vm255, %v677, 0.0
    %v684 = vsel %vm256, %v680, 0.0
    %v685 = vmax.f32 %v665, %v681
    %v686 = vmax.f32 %v666, %v682
    %v687 = vmax.f32 %v667, %v683
    %v688 = vmax.f32 %v668, %v684
    %689 = vrot.lane.b32.xlu0 %v665, 1
    %v690 = vpop.permute.xlu0 %689
    %691 = vrot.lane.b32.xlu0 %v666, 1
    %v692 = vpop.permute.xlu0 %691
    %693 = vrot.lane.b32.xlu0 %v667, 1
    %v694 = vpop.permute.xlu0 %693
    %695 = vrot.lane.b32.xlu0 %v668, 1
    %v696 = vpop.permute.xlu0 %695
    %v697 = vsel %vm370, %v694, %v696
    %v698 = vsel %vm370, %v692, %v694
    %v699 = vsel %vm370, %v690, %v692
    %v700 = vsel %vm370, %v696, %v690
    %v701 = vsel %vm277, %v700, 0.0
    %v702 = vsel %vm278, %v699, 0.0
    %v703 = vsel %vm279, %v698, 0.0
    %v704 = vsel %vm280, %v697, 0.0
    %v705 = vmax.f32 %v685, %v701
    %v706 = vmax.f32 %v686, %v702
    %v707 = vmax.f32 %v687, %v703
    %v708 = vmax.f32 %v688, %v704
    %709 = vrot.lane.b32.xlu0 %v665, 126
    %v710 = vpop.permute.xlu0 %709
    %711 = vrot.lane.b32.xlu0 %v666, 126
    %v712 = vpop.permute.xlu0 %711
    %713 = vrot.lane.b32.xlu0 %v667, 126
    %v714 = vpop.permute.xlu0 %713
    %715 = vrot.lane.b32.xlu0 %v668, 126
    %v716 = vpop.permute.xlu0 %715
    %v717 = vsel %vm391, %v714, %v716
    %v718 = vsel %vm391, %v712, %v714
    %v719 = vsel %vm391, %v710, %v712
    %v720 = vsel %vm391, %v716, %v710
    %v721 = vsel %vm265, %v719, 0.0
    %v722 = vsel %vm266, %v718, 0.0
    %v723 = vsel %vm267, %v717, 0.0
    %v724 = vsel %vm268, %v720, 0.0
    %v725 = vmax.f32 %v705, %v721
    %v726 = vmax.f32 %v706, %v722
    %v727 = vmax.f32 %v707, %v723
    %v728 = vmax.f32 %v708, %v724
    %729 = vrot.lane.b32.xlu0 %v665, 2
    %v730 = vpop.permute.xlu0 %729
    %731 = vrot.lane.b32.xlu0 %v666, 2
    %v732 = vpop.permute.xlu0 %731
    %733 = vrot.lane.b32.xlu0 %v667, 2
    %v734 = vpop.permute.xlu0 %733
    %735 = vrot.lane.b32.xlu0 %v668, 2
    %v736 = vpop.permute.xlu0 %735
    %v737 = vsel %vm412, %v734, %v736
    %v738 = vsel %vm412, %v732, %v734
    %v739 = vsel %vm412, %v730, %v732
    %v740 = vsel %vm412, %v736, %v730
    %v741 = vsel %vm289, %v740, 0.0
    %v742 = vsel %vm290, %v739, 0.0
    %v743 = vsel %vm291, %v738, 0.0
    %v744 = vsel %vm292, %v737, 0.0
    %v745 = vmax.f32 %v725, %v741
    %v746 = vmax.f32 %v726, %v742
    %v747 = vmax.f32 %v727, %v743
    %v748 = vmax.f32 %v728, %v744
    %749 = vrot.lane.b32.xlu0 %v745, 112
    %v750 = vpop.permute.xlu0 %749
    %751 = vrot.lane.b32.xlu0 %v746, 112
    %v752 = vpop.permute.xlu0 %751
    %753 = vrot.lane.b32.xlu0 %v747, 112
    %v754 = vpop.permute.xlu0 %753
    %755 = vrot.lane.b32.xlu0 %v748, 112
    %v756 = vpop.permute.xlu0 %755
    %v757 = vsel %vm433, %v754, %v756
    %v758 = vsel %vm433, %v752, %v754
    %v759 = vsel %vm433, %v750, %v752
    %v760 = vsel %vm433, %v756, %v750
    %v761 = vsel %vm301, %v759, 0.0
    %v762 = vsel %vm302, %v758, 0.0
    %v763 = vsel %vm303, %v757, 0.0
    %v764 = vsel %vm304, %v760, 0.0
    %v765 = vmax.f32 %v745, %v761
    %v766 = vmax.f32 %v746, %v762
    %v767 = vmax.f32 %v747, %v763
    %v768 = vmax.f32 %v748, %v764
    %769 = vrot.lane.b32.xlu0 %v745, 16
    %v770 = vpop.permute.xlu0 %769
    %771 = vrot.lane.b32.xlu0 %v746, 16
    %v772 = vpop.permute.xlu0 %771
    %773 = vrot.lane.b32.xlu0 %v747, 16
    %v774 = vpop.permute.xlu0 %773
    %775 = vrot.lane.b32.xlu0 %v748, 16
    %v776 = vpop.permute.xlu0 %775
    %v777 = vsel %vm454, %v774, %v776
    %v778 = vsel %vm454, %v772, %v774
    %v779 = vsel %vm454, %v770, %v772
    %v780 = vsel %vm454, %v776, %v770
    %v781 = vsel %vm325, %v780, 0.0
    %v782 = vsel %vm326, %v779, 0.0
    %v783 = vsel %vm327, %v778, 0.0
    %v784 = vsel %vm328, %v777, 0.0
    %v785 = vmax.f32 %v765, %v781
    %v786 = vmax.f32 %v766, %v782
    %v787 = vmax.f32 %v767, %v783
    %v788 = vmax.f32 %v768, %v784
    %789 = vrot.lane.b32.xlu0 %v745, 96
    %v790 = vpop.permute.xlu0 %789
    %791 = vrot.lane.b32.xlu0 %v746, 96
    %v792 = vpop.permute.xlu0 %791
    %793 = vrot.lane.b32.xlu0 %v747, 96
    %v794 = vpop.permute.xlu0 %793
    %795 = vrot.lane.b32.xlu0 %v748, 96
    %v796 = vpop.permute.xlu0 %795
    %v797 = vsel %vm475, %v794, %v796
    %v798 = vsel %vm475, %v792, %v794
    %v799 = vsel %vm475, %v790, %v792
    %v800 = vsel %vm475, %v796, %v790
    %v801 = vsel %vm313, %v799, 0.0
    %v802 = vsel %vm314, %v798, 0.0
    %v803 = vsel %vm315, %v797, 0.0
    %v804 = vsel %vm316, %v800, 0.0
    %v805 = vmax.f32 %v785, %v801
    %v806 = vmax.f32 %v786, %v802
    %v807 = vmax.f32 %v787, %v803
    %v808 = vmax.f32 %v788, %v804
    %809 = vrot.lane.b32.xlu0 %v745, 32
    %v810 = vpop.permute.xlu0 %809
    %811 = vrot.lane.b32.xlu0 %v746, 32
    %v812 = vpop.permute.xlu0 %811
    %813 = vrot.lane.b32.xlu0 %v747, 32
    %v814 = vpop.permute.xlu0 %813
    %815 = vrot.lane.b32.xlu0 %v748, 32
    %v816 = vpop.permute.xlu0 %815
    %v817 = vsel %vm496, %v814, %v816
    %v818 = vsel %vm496, %v812, %v814
    %v819 = vsel %vm496, %v810, %v812
    %v820 = vsel %vm496, %v816, %v810
    %v821 = vsel %vm337, %v820, 0.0
    %v822 = vsel %vm338, %v819, 0.0
    %v823 = vsel %vm339, %v818, 0.0
    %v824 = vsel %vm340, %v817, 0.0
    %v825 = vmax.f32 %v805, %v821
    %v826 = vmax.f32 %v806, %v822
    %v827 = vmax.f32 %v807, %v823
    %v828 = vmax.f32 %v808, %v824
    %v829 = vld [vmem:[%s3] sm:$0xf]
    %v830 = vld [vmem:[%s3 + $0x4] sm:$0xf]
    %v831 = vpack.c.bf16 %v140, %v140
    %v832 = vpack.c.bf16 %v141, %v141
    %v833 = vpack.c.bf16 %v142, %v142
    %v834 = vpack.c.bf16 %v143, %v143
    %s835 = scalar_lea.vmem %s3, 8
    %v836 = vld [vmem:[%s835] sm:$0xf]
    %v837 = vld [vmem:[%s835 + $0x4] sm:$0xf]
    %v838 = vpack.c.bf16 %v505, %v505
    %v839 = vpack.c.bf16 %v506, %v506
    %v840 = vpack.c.bf16 %v507, %v507
    %v841 = vpack.c.bf16 %v508, %v508
    %v844 = vunpack.c.l.b16 %v836
    %v845 = vunpack.c.l.b16 %v837
    %v846 = vpack.c.b16 %v845, %v844
    %vm847 = vcmask 31744
    %v849 = vsel %vm847, %v846, 0
    %vm851 = vcmask 1041408
    %v853 = vsel %vm851, %v838, 0
    %v856 = vsel %vm851, %v839, 0
    %v859 = vsel %vm851, %v840, 0
    %v862 = vsel %vm851, %v841, 0
    %864 = vmatprep.subr.bf16.mxu0 %v856
    %865 = vmatpush1.bf16.msra.mxu0 %v853
    %866 = vmatprep.subr.bf16.mxu0 0
    %867 = vmatpush1.bf16.msra.mxu0 0
    %868 = vmatprep.subr.bf16.mxu0 0
    %869 = vmatpush1.bf16.msra.mxu0 0
    %870 = vmatprep.subr.bf16.mxu0 0
    %871 = vmatpush1.bf16.msra.mxu0 0
    %872 = vmatprep.subr.bf16.mxu0 0
    %873 = vmatpush1.bf16.msra.mxu0 0
    %874 = vmatprep.subr.bf16.mxu0 0
    %875 = vmatpush1.bf16.msra.mxu0 0
    %876 = vmatprep.subr.bf16.mxu0 0
    %877 = vmatpush1.bf16.msra.mxu0 0
    %878 = vmatprep.subr.bf16.mxu0 0
    %879 = vmatpush1.bf16.msra.mxu0 0
    %880 = vmatprep.subr.bf16.mxu0 0
    %881 = vmatpush1.bf16.msra.mxu0 0
    %882 = vmatprep.subr.bf16.mxu0 0
    %883 = vmatpush1.bf16.msra.mxu0 0
    %884 = vmatprep.subr.bf16.mxu0 0
    %885 = vmatpush1.bf16.msra.mxu0 0
    %886 = vmatprep.subr.bf16.mxu0 0
    %887 = vmatpush1.bf16.msra.mxu0 0
    %888 = vmatprep.subr.bf16.mxu0 0
    %889 = vmatpush1.bf16.msra.mxu0 0
    %890 = vmatprep.subr.bf16.mxu0 0
    %891 = vmatpush1.bf16.msra.mxu0 0
    %892 = vmatprep.subr.bf16.mxu0 0
    %893 = vmatpush1.bf16.msra.mxu0 0
    %894 = vmatprep.subr.bf16.mxu0 0
    %895 = vmatpush1.bf16.msra.mxu0 0
    %896 = vmatprep.mubr.bf16.mxu0 0
    %897 = vmatmul.mubr.bf16.gmra.mrb[0].mxu0 %v849
    %v898 = vpop.f32.mrb[0].mxu0
    %v899 = vadd.f32 0.0, %v898
    %v900 = vpop.f32.mrb[0].mxu0
    %v901 = vadd.f32 0.0, %v900
    %v902 = vpop.f32.mrb[0].mxu0
    %v903 = vadd.f32 0.0, %v902
    %v904 = vpop.f32.mrb[0].mxu0
    %v905 = vadd.f32 0.0, %v904
    %906 = vdwg.mxu0
    %907 = vmatprep.subr.bf16.mxu0 %v862
    %908 = vmatpush1.bf16.msra.mxu0 %v859
    %909 = vmatprep.subr.bf16.mxu0 0
    %910 = vmatpush1.bf16.msra.mxu0 0
    %911 = vmatprep.subr.bf16.mxu0 0
    %912 = vmatpush1.bf16.msra.mxu0 0
    %913 = vmatprep.subr.bf16.mxu0 0
    %914 = vmatpush1.bf16.msra.mxu0 0
    %915 = vmatprep.subr.bf16.mxu0 0
    %916 = vmatpush1.bf16.msra.mxu0 0
    %917 = vmatprep.subr.bf16.mxu0 0
    %918 = vmatpush1.bf16.msra.mxu0 0
    %919 = vmatprep.subr.bf16.mxu0 0
    %920 = vmatpush1.bf16.msra.mxu0 0
    %921 = vmatprep.subr.bf16.mxu0 0
    %922 = vmatpush1.bf16.msra.mxu0 0
    %923 = vmatprep.subr.bf16.mxu0 0
    %924 = vmatpush1.bf16.msra.mxu0 0
    %925 = vmatprep.subr.bf16.mxu0 0
    %926 = vmatpush1.bf16.msra.mxu0 0
    %927 = vmatprep.subr.bf16.mxu0 0
    %928 = vmatpush1.bf16.msra.mxu0 0
    %929 = vmatprep.subr.bf16.mxu0 0
    %930 = vmatpush1.bf16.msra.mxu0 0
    %931 = vmatprep.subr.bf16.mxu0 0
    %932 = vmatpush1.bf16.msra.mxu0 0
    %933 = vmatprep.subr.bf16.mxu0 0
    %934 = vmatpush1.bf16.msra.mxu0 0
    %935 = vmatprep.subr.bf16.mxu0 0
    %936 = vmatpush1.bf16.msra.mxu0 0
    %937 = vmatprep.subr.bf16.mxu0 0
    %938 = vmatpush1.bf16.msra.mxu0 0
    %939 = vmatprep.mubr.bf16.mxu0 0
    %940 = vmatmul.mubr.bf16.gmra.mrb[0].mxu0 %v849
    %v941 = vpop.f32.mrb[0].mxu0
    %v942 = vadd.f32 0.0, %v941
    %v943 = vpop.f32.mrb[0].mxu0
    %v944 = vadd.f32 0.0, %v943
    %v945 = vpop.f32.mrb[0].mxu0
    %v946 = vadd.f32 0.0, %v945
    %v947 = vpop.f32.mrb[0].mxu0
    %v948 = vadd.f32 0.0, %v947
    %949 = vdwg.mxu0
    %s950 = scalar_lea.vmem %s3, 16
    %v951 = vld [vmem:[%s950] sm:$0xf]
    %v952 = vld [vmem:[%s950 + $0x4] sm:$0xf]
    %v953 = vpack.c.bf16 %v665, %v665
    %v954 = vpack.c.bf16 %v666, %v666
    %v955 = vpack.c.bf16 %v667, %v667
    %v956 = vpack.c.bf16 %v668, %v668
    %s957 = scalar_lea.vmem %s3, 24
    %v958 = vld [vmem:[%s957] sm:$0xf]
    %v959 = vld [vmem:[%s957 + $0x4] sm:$0xf]
    %v960 = vpack.c.bf16 %v825, %v825
    %v961 = vpack.c.bf16 %v826, %v826
    %v962 = vpack.c.bf16 %v827, %v827
    %v963 = vpack.c.bf16 %v828, %v828
    %v966 = vunpack.c.l.b16 %v958
    %v967 = vunpack.c.l.b16 %v959
    %v968 = vpack.c.b16 %v967, %v966
    %v970 = vsel %vm847, %v968, 0
    %v973 = vsel %vm851, %v960, 0
    %v976 = vsel %vm851, %v961, 0
    %v979 = vsel %vm851, %v962, 0
    %v982 = vsel %vm851, %v963, 0
    %984 = vmatprep.subr.bf16.mxu0 %v976
    %985 = vmatpush1.bf16.msra.mxu0 %v973
    %986 = vmatprep.subr.bf16.mxu0 0
    %987 = vmatpush1.bf16.msra.mxu0 0
    %988 = vmatprep.subr.bf16.mxu0 0
    %989 = vmatpush1.bf16.msra.mxu0 0
    %990 = vmatprep.subr.bf16.mxu0 0
    %991 = vmatpush1.bf16.msra.mxu0 0
    %992 = vmatprep.subr.bf16.mxu0 0
    %993 = vmatpush1.bf16.msra.mxu0 0
    %994 = vmatprep.subr.bf16.mxu0 0
    %995 = vmatpush1.bf16.msra.mxu0 0
    %996 = vmatprep.subr.bf16.mxu0 0
    %997 = vmatpush1.bf16.msra.mxu0 0
    %998 = vmatprep.subr.bf16.mxu0 0
    %999 = vmatpush1.bf16.msra.mxu0 0
    %1000 = vmatprep.subr.bf16.mxu0 0
    %1001 = vmatpush1.bf16.msra.mxu0 0
    %1002 = vmatprep.subr.bf16.mxu0 0
    %1003 = vmatpush1.bf16.msra.mxu0 0
    %1004 = vmatprep.subr.bf16.mxu0 0
    %1005 = vmatpush1.bf16.msra.mxu0 0
    %1006 = vmatprep.subr.bf16.mxu0 0
    %1007 = vmatpush1.bf16.msra.mxu0 0
    %1008 = vmatprep.subr.bf16.mxu0 0
    %1009 = vmatpush1.bf16.msra.mxu0 0
    %1010 = vmatprep.subr.bf16.mxu0 0
    %1011 = vmatpush1.bf16.msra.mxu0 0
    %1012 = vmatprep.subr.bf16.mxu0 0
    %1013 = vmatpush1.bf16.msra.mxu0 0
    %1014 = vmatprep.subr.bf16.mxu0 0
    %1015 = vmatpush1.bf16.msra.mxu0 0
    %1016 = vmatprep.mubr.bf16.mxu0 0
    %1017 = vmatmul.mubr.bf16.gmra.mrb[0].mxu0 %v970
    %v1018 = vpop.f32.mrb[0].mxu0
    %v1019 = vadd.f32 0.0, %v1018
    %v1020 = vpop.f32.mrb[0].mxu0
    %v1021 = vadd.f32 0.0, %v1020
    %v1022 = vpop.f32.mrb[0].mxu0
    %v1023 = vadd.f32 0.0, %v1022
    %v1024 = vpop.f32.mrb[0].mxu0
    %v1025 = vadd.f32 0.0, %v1024
    %1026 = vdwg.mxu0
    %1027 = vmatprep.subr.bf16.mxu0 %v982
    %1028 = vmatpush1.bf16.msra.mxu0 %v979
    %1029 = vmatprep.subr.bf16.mxu0 0
    %1030 = vmatpush1.bf16.msra.mxu0 0
    %1031 = vmatprep.subr.bf16.mxu0 0
    %1032 = vmatpush1.bf16.msra.mxu0 0
    %1033 = vmatprep.subr.bf16.mxu0 0
    %1034 = vmatpush1.bf16.msra.mxu0 0
    %1035 = vmatprep.subr.bf16.mxu0 0
    %1036 = vmatpush1.bf16.msra.mxu0 0
    %1037 = vmatprep.subr.bf16.mxu0 0
    %1038 = vmatpush1.bf16.msra.mxu0 0
    %1039 = vmatprep.subr.bf16.mxu0 0
    %1040 = vmatpush1.bf16.msra.mxu0 0
    %1041 = vmatprep.subr.bf16.mxu0 0
    %1042 = vmatpush1.bf16.msra.mxu0 0
    %1043 = vmatprep.subr.bf16.mxu0 0
    %1044 = vmatpush1.bf16.msra.mxu0 0
    %1045 = vmatprep.subr.bf16.mxu0 0
    %1046 = vmatpush1.bf16.msra.mxu0 0
    %1047 = vmatprep.subr.bf16.mxu0 0
    %1048 = vmatpush1.bf16.msra.mxu0 0
    %1049 = vmatprep.subr.bf16.mxu0 0
    %1050 = vmatpush1.bf16.msra.mxu0 0
    %1051 = vmatprep.subr.bf16.mxu0 0
    %1052 = vmatpush1.bf16.msra.mxu0 0
    %1053 = vmatprep.subr.bf16.mxu0 0
    %1054 = vmatpush1.bf16.msra.mxu0 0
    %1055 = vmatprep.subr.bf16.mxu0 0
    %1056 = vmatpush1.bf16.msra.mxu0 0
    %1057 = vmatprep.subr.bf16.mxu0 0
    %1058 = vmatpush1.bf16.msra.mxu0 0
    %1059 = vmatprep.mubr.bf16.mxu0 0
    %1060 = vmatmul.mubr.bf16.gmra.mrb[0].mxu0 %v970
    %v1061 = vpop.f32.mrb[0].mxu0
    %v1062 = vadd.f32 0.0, %v1061
    %v1063 = vpop.f32.mrb[0].mxu0
    %v1064 = vadd.f32 0.0, %v1063
    %v1065 = vpop.f32.mrb[0].mxu0
    %v1066 = vadd.f32 0.0, %v1065
    %v1067 = vpop.f32.mrb[0].mxu0
    %v1068 = vadd.f32 0.0, %v1067
    %1069 = vdwg.mxu0
    %v1072 = vunpack.c.l.b16 %v829
    %v1073 = vunpack.c.l.b16 %v830
    %v1074 = vpack.c.b16 %v1073, %v1072
    %v1076 = vsel %vm847, %v1074, 0
    %v1079 = vsel %vm851, %v831, 0
    %v1082 = vsel %vm851, %v832, 0
    %v1085 = vsel %vm851, %v833, 0
    %v1088 = vsel %vm851, %v834, 0
    %1090 = vmatprep.subr.bf16.mxu0 %v1082
    %1091 = vmatpush1.bf16.msra.mxu0 %v1079
    %1092 = vmatprep.subr.bf16.mxu0 0
    %1093 = vmatpush1.bf16.msra.mxu0 0
    %1094 = vmatprep.subr.bf16.mxu0 0
    %1095 = vmatpush1.bf16.msra.mxu0 0
    %1096 = vmatprep.subr.bf16.mxu0 0
    %1097 = vmatpush1.bf16.msra.mxu0 0
    %1098 = vmatprep.subr.bf16.mxu0 0
    %1099 = vmatpush1.bf16.msra.mxu0 0
    %1100 = vmatprep.subr.bf16.mxu0 0
    %1101 = vmatpush1.bf16.msra.mxu0 0
    %1102 = vmatprep.subr.bf16.mxu0 0
    %1103 = vmatpush1.bf16.msra.mxu0 0
    %1104 = vmatprep.subr.bf16.mxu0 0
    %1105 = vmatpush1.bf16.msra.mxu0 0
    %1106 = vmatprep.subr.bf16.mxu0 0
    %1107 = vmatpush1.bf16.msra.mxu0 0
    %1108 = vmatprep.subr.bf16.mxu0 0
    %1109 = vmatpush1.bf16.msra.mxu0 0
    %1110 = vmatprep.subr.bf16.mxu0 0
    %1111 = vmatpush1.bf16.msra.mxu0 0
    %1112 = vmatprep.subr.bf16.mxu0 0
    %1113 = vmatpush1.bf16.msra.mxu0 0
    %1114 = vmatprep.subr.bf16.mxu0 0
    %1115 = vmatpush1.bf16.msra.mxu0 0
    %1116 = vmatprep.subr.bf16.mxu0 0
    %1117 = vmatpush1.bf16.msra.mxu0 0
    %1118 = vmatprep.subr.bf16.mxu0 0
    %1119 = vmatpush1.bf16.msra.mxu0 0
    %1120 = vmatprep.subr.bf16.mxu0 0
    %1121 = vmatpush1.bf16.msra.mxu0 0
    %1122 = vmatprep.mubr.bf16.mxu0 0
    %1123 = vmatmul.mubr.bf16.gmra.mrb[0].mxu0 %v1076
    %v1124 = vpop.f32.mrb[0].mxu0
    %v1125 = vadd.f32 %v899, %v1124
    %v1126 = vpop.f32.mrb[0].mxu0
    %v1127 = vadd.f32 %v901, %v1126
    %v1128 = vpop.f32.mrb[0].mxu0
    %v1129 = vadd.f32 %v903, %v1128
    %v1130 = vpop.f32.mrb[0].mxu0
    %v1131 = vadd.f32 %v905, %v1130
    %1132 = vdwg.mxu0
    %1133 = vmatprep.subr.bf16.mxu0 %v1088
    %1134 = vmatpush1.bf16.msra.mxu0 %v1085
    %1135 = vmatprep.subr.bf16.mxu0 0
    %1136 = vmatpush1.bf16.msra.mxu0 0
    %1137 = vmatprep.subr.bf16.mxu0 0
    %1138 = vmatpush1.bf16.msra.mxu0 0
    %1139 = vmatprep.subr.bf16.mxu0 0
    %1140 = vmatpush1.bf16.msra.mxu0 0
    %1141 = vmatprep.subr.bf16.mxu0 0
    %1142 = vmatpush1.bf16.msra.mxu0 0
    %1143 = vmatprep.subr.bf16.mxu0 0
    %1144 = vmatpush1.bf16.msra.mxu0 0
    %1145 = vmatprep.subr.bf16.mxu0 0
    %1146 = vmatpush1.bf16.msra.mxu0 0
    %1147 = vmatprep.subr.bf16.mxu0 0
    %1148 = vmatpush1.bf16.msra.mxu0 0
    %1149 = vmatprep.subr.bf16.mxu0 0
    %1150 = vmatpush1.bf16.msra.mxu0 0
    %1151 = vmatprep.subr.bf16.mxu0 0
    %1152 = vmatpush1.bf16.msra.mxu0 0
    %1153 = vmatprep.subr.bf16.mxu0 0
    %1154 = vmatpush1.bf16.msra.mxu0 0
    %1155 = vmatprep.subr.bf16.mxu0 0
    %1156 = vmatpush1.bf16.msra.mxu0 0
    %1157 = vmatprep.subr.bf16.mxu0 0
    %1158 = vmatpush1.bf16.msra.mxu0 0
    %1159 = vmatprep.subr.bf16.mxu0 0
    %1160 = vmatpush1.bf16.msra.mxu0 0
    %1161 = vmatprep.subr.bf16.mxu0 0
    %1162 = vmatpush1.bf16.msra.mxu0 0
    %1163 = vmatprep.subr.bf16.mxu0 0
    %1164 = vmatpush1.bf16.msra.mxu0 0
    %1165 = vmatprep.mubr.bf16.mxu0 0
    %1166 = vmatmul.mubr.bf16.gmra.mrb[0].mxu0 %v1076
    %v1167 = vpop.f32.mrb[0].mxu0
    %v1168 = vadd.f32 %v942, %v1167
    %v1169 = vpop.f32.mrb[0].mxu0
    %v1170 = vadd.f32 %v944, %v1169
    %v1171 = vpop.f32.mrb[0].mxu0
    %v1172 = vadd.f32 %v946, %v1171
    %v1173 = vpop.f32.mrb[0].mxu0
    %v1174 = vadd.f32 %v948, %v1173
    %1175 = vdwg.mxu0
    %v1178 = vunpack.c.l.b16 %v951
    %v1179 = vunpack.c.l.b16 %v952
    %v1180 = vpack.c.b16 %v1179, %v1178
    %v1182 = vsel %vm847, %v1180, 0
    %v1185 = vsel %vm851, %v953, 0
    %v1188 = vsel %vm851, %v954, 0
    %v1191 = vsel %vm851, %v955, 0
    %v1194 = vsel %vm851, %v956, 0
    %1196 = vmatprep.subr.bf16.mxu0 %v1188
    %1197 = vmatpush1.bf16.msra.mxu0 %v1185
    %1198 = vmatprep.subr.bf16.mxu0 0
    %1199 = vmatpush1.bf16.msra.mxu0 0
    %1200 = vmatprep.subr.bf16.mxu0 0
    %1201 = vmatpush1.bf16.msra.mxu0 0
    %1202 = vmatprep.subr.bf16.mxu0 0
    %1203 = vmatpush1.bf16.msra.mxu0 0
    %1204 = vmatprep.subr.bf16.mxu0 0
    %1205 = vmatpush1.bf16.msra.mxu0 0
    %1206 = vmatprep.subr.bf16.mxu0 0
    %1207 = vmatpush1.bf16.msra.mxu0 0
    %1208 = vmatprep.subr.bf16.mxu0 0
    %1209 = vmatpush1.bf16.msra.mxu0 0
    %1210 = vmatprep.subr.bf16.mxu0 0
    %1211 = vmatpush1.bf16.msra.mxu0 0
    %1212 = vmatprep.subr.bf16.mxu0 0
    %1213 = vmatpush1.bf16.msra.mxu0 0
    %1214 = vmatprep.subr.bf16.mxu0 0
    %1215 = vmatpush1.bf16.msra.mxu0 0
    %1216 = vmatprep.subr.bf16.mxu0 0
    %1217 = vmatpush1.bf16.msra.mxu0 0
    %1218 = vmatprep.subr.bf16.mxu0 0
    %1219 = vmatpush1.bf16.msra.mxu0 0
    %1220 = vmatprep.subr.bf16.mxu0 0
    %1221 = vmatpush1.bf16.msra.mxu0 0
    %1222 = vmatprep.subr.bf16.mxu0 0
    %1223 = vmatpush1.bf16.msra.mxu0 0
    %1224 = vmatprep.subr.bf16.mxu0 0
    %1225 = vmatpush1.bf16.msra.mxu0 0
    %1226 = vmatprep.subr.bf16.mxu0 0
    %1227 = vmatpush1.bf16.msra.mxu0 0
    %1228 = vmatprep.mubr.bf16.mxu0 0
    %1229 = vmatmul.mubr.bf16.gmra.mrb[0].mxu0 %v1182
    %v1230 = vpop.f32.mrb[0].mxu0
    %v1231 = vadd.f32 %v1019, %v1230
    %v1232 = vpop.f32.mrb[0].mxu0
    %v1233 = vadd.f32 %v1021, %v1232
    %v1234 = vpop.f32.mrb[0].mxu0
    %v1235 = vadd.f32 %v1023, %v1234
    %v1236 = vpop.f32.mrb[0].mxu0
    %v1237 = vadd.f32 %v1025, %v1236
    %1238 = vdwg.mxu0
    %1239 = vmatprep.subr.bf16.mxu0 %v1194
    %1240 = vmatpush1.bf16.msra.mxu0 %v1191
    %1241 = vmatprep.subr.bf16.mxu0 0
    %1242 = vmatpush1.bf16.msra.mxu0 0
    %1243 = vmatprep.subr.bf16.mxu0 0
    %1244 = vmatpush1.bf16.msra.mxu0 0
    %1245 = vmatprep.subr.bf16.mxu0 0
    %1246 = vmatpush1.bf16.msra.mxu0 0
    %1247 = vmatprep.subr.bf16.mxu0 0
    %1248 = vmatpush1.bf16.msra.mxu0 0
    %1249 = vmatprep.subr.bf16.mxu0 0
    %1250 = vmatpush1.bf16.msra.mxu0 0
    %1251 = vmatprep.subr.bf16.mxu0 0
    %1252 = vmatpush1.bf16.msra.mxu0 0
    %1253 = vmatprep.subr.bf16.mxu0 0
    %1254 = vmatpush1.bf16.msra.mxu0 0
    %1255 = vmatprep.subr.bf16.mxu0 0
    %1256 = vmatpush1.bf16.msra.mxu0 0
    %1257 = vmatprep.subr.bf16.mxu0 0
    %1258 = vmatpush1.bf16.msra.mxu0 0
    %1259 = vmatprep.subr.bf16.mxu0 0
    %1260 = vmatpush1.bf16.msra.mxu0 0
    %1261 = vmatprep.subr.bf16.mxu0 0
    %1262 = vmatpush1.bf16.msra.mxu0 0
    %1263 = vmatprep.subr.bf16.mxu0 0
    %1264 = vmatpush1.bf16.msra.mxu0 0
    %1265 = vmatprep.subr.bf16.mxu0 0
    %1266 = vmatpush1.bf16.msra.mxu0 0
    %1267 = vmatprep.subr.bf16.mxu0 0
    %1268 = vmatpush1.bf16.msra.mxu0 0
    %1269 = vmatprep.subr.bf16.mxu0 0
    %1270 = vmatpush1.bf16.msra.mxu0 0
    %1271 = vmatprep.mubr.bf16.mxu0 0
    %1272 = vmatmul.mubr.bf16.gmra.mrb[0].mxu0 %v1182
    %v1273 = vpop.f32.mrb[0].mxu0
    %v1274 = vadd.f32 %v1062, %v1273
    %v1275 = vpop.f32.mrb[0].mxu0
    %v1276 = vadd.f32 %v1064, %v1275
    %v1277 = vpop.f32.mrb[0].mxu0
    %v1278 = vadd.f32 %v1066, %v1277
    %v1279 = vpop.f32.mrb[0].mxu0
    %v1280 = vadd.f32 %v1068, %v1279
    %1281 = vdwg.mxu0
    %v1282 = vadd.f32 %v1125, %v1231
    %v1283 = vadd.f32 %v1127, %v1233
    %v1284 = vadd.f32 %v1168, %v1274
    %v1285 = vadd.f32 %v1170, %v1276
    %v1286 = vadd.f32 %v1129, %v1235
    %v1287 = vadd.f32 %v1131, %v1237
    %v1288 = vadd.f32 %v1172, %v1278
    %v1289 = vadd.f32 %v1174, %v1280
    %v1290 = vld [vmem:[%s4] sm:$0xff]
    %v1291 = vld [vmem:[%s4 + $0x8] sm:$0xff]
    %1293 = vset.pattern.permute.xlu0 0
    %1294 = vperm.xlu0 %1293, %v1290
    %v1295 = vpop.permute.xlu0 %1294
    %1298 = vset.pattern.permute.xlu0 0
    %1299 = vperm.xlu0 %1298, %v1291
    %v1300 = vpop.permute.xlu0 %1299
    %v1302 = vadd.f32 %v1282, %v1295
    %v1303 = vadd.f32 %v1283, %v1295
    %v1304 = vadd.f32 %v1284, %v1295
    %v1305 = vadd.f32 %v1285, %v1295
    %v1306 = vadd.f32 %v1286, %v1300
    %v1307 = vadd.f32 %v1287, %v1300
    %v1308 = vadd.f32 %v1288, %v1300
    %v1309 = vadd.f32 %v1289, %v1300
    %v1310 = vmax.f32 %v1302, 0.0
    %v1311 = vmax.f32 %v1303, 0.0
    %v1312 = vmax.f32 %v1304, 0.0
    %v1313 = vmax.f32 %v1305, 0.0
    %v1314 = vmax.f32 %v1306, 0.0
    %v1315 = vmax.f32 %v1307, 0.0
    %v1316 = vmax.f32 %v1308, 0.0
    %v1317 = vmax.f32 %v1309, 0.0
    %1318 = vst [vmem:[#allocation2] sm:$0xff] %v1310
    %1319 = vst [vmem:[#allocation2 + $0x8] sm:$0xff] %v1311
    %1320 = vst [vmem:[#allocation2 + $0x10] sm:$0xff] %v1312
    %1321 = vst [vmem:[#allocation2 + $0x18] sm:$0xff] %v1313
    %1322 = vst [vmem:[#allocation2 + $0x20] sm:$0xff] %v1314
    %1323 = vst [vmem:[#allocation2 + $0x28] sm:$0xff] %v1315
    %1324 = vst [vmem:[#allocation2 + $0x30] sm:$0xff] %v1316
    %1325 = vst [vmem:[#allocation2 + $0x38] sm:$0xff] %v1317
    // Predicated region
    $region22: #{tpu_custom_call.1} parent=1 // pred_check
      _
    $region23: #{tpu_custom_call.1} parent=1 // pred_check_branch
      %1327 = sbr.rel (0) target = $region25
    $region24: #{tpu_custom_call.1} parent=1 // pred_region
      %s1329 = ssub.s32 1024, 1024
      %1330 = vsyncadd [#allocation3], %s1329
      %s1331 = sshll.u32 [#allocation2], 4
      %s1332 = int_to_ptr.vmem [resolvable:$true] %s1331
      %1337 = dma.vmem_to_hbm [thread:$0]  %s1332, 1024, %s5, [#allocation3], 512, 512, 32
    $region25: #{tpu_custom_call.1} parent=1 // pred_fallthru
      _
    // Predicated region
    $region26: #{tpu_custom_call.1} parent=1 // pred_check
      _
    $region27: #{tpu_custom_call.1} parent=1 // pred_check_branch
      %1339 = sbr.rel (0) target = $region29
    $region28: #{tpu_custom_call.1} parent=1 // pred_region
      %1340 = dma.done [#allocation3], 1024
    $region29: #{tpu_custom_call.1} parent=1 // pred_fallthru
      _
    %1341 = vsyncpa [#allocation3], 1

</llo_original>
